<compile_context>
chip_gen: v7x
topology: tpu7x:2x2x1
jax: 0.10.0
libtpu: 0.0.40
codegen_flags: <defaults>
</compile_context>

<pallas_src>
import jax
import jax.numpy as jnp
from jax.experimental import pallas as pl
from jax.experimental.pallas import tpu as pltpu

# ---- hyper-parameters from the PyTorch spec ----
N_EMBD = 32
N_HIDDEN_EXPERT = 4 * N_EMBD          # Expert hidden width (4 * n_embd) = 128
BLOCK_SIZE = 8
WINDOW_SIZE = 3
N_GROUPS = 2
N_HEADS = 4
N_KV_HEADS = N_HEADS // N_GROUPS
N_Q_HEADS = N_HEADS // N_KV_HEADS     # queries per head = 2
D_HEAD = N_EMBD // N_HEADS            # 8
N_EXPERTS = 2
TOP_K = 1
EPS = 1e-5
GATE_PAD = 128                        # gate columns padded to one lane tile

# rows of the packed (1-D params) slab
_LNP_GAMMA1, _LNP_BETA1, _LNP_GAMMA2, _LNP_BETA2, _LNP_BPROJ = 0, 1, 2, 3, 4
_LNP_B2 = 5                           # rows 5 .. 5 + N_EXPERTS - 1
_LNP_SBETA = 5 + N_EXPERTS            # swish betas, column e


# ----------------------------------------------------------------------------
# Kernel
# ----------------------------------------------------------------------------
def _moe_block_kernel(
    x_ref, lnp_ref, wqkv_ref, wproj_ref, wupg_ref, bupg_ref,
    wsg_ref, bsg_ref, wdown_ref, o_ref,
):
    f32 = jnp.float32
    x = x_ref[...].astype(f32)                  # (N, C), N = batch_tile * T rows
    N, C = x.shape
    T = BLOCK_SIZE
    Bt = N // T
    H = N_HIDDEN_EXPERT

    inv_c = 1.0 / C
    inv_cm1 = 1.0 / (C - 1)

    gamma1 = lnp_ref[_LNP_GAMMA1:_LNP_GAMMA1 + 1, :]
    beta1 = lnp_ref[_LNP_BETA1:_LNP_BETA1 + 1, :]
    gamma2 = lnp_ref[_LNP_GAMMA2:_LNP_GAMMA2 + 1, :]
    beta2 = lnp_ref[_LNP_BETA2:_LNP_BETA2 + 1, :]
    b_proj = lnp_ref[_LNP_BPROJ:_LNP_BPROJ + 1, :]

    def layer_norm(v, g, b):
        # matches the reference LayerNorm: torch.var default (unbiased, N-1)
        mean = jnp.sum(v, axis=-1, keepdims=True) * inv_c
        d = v - mean
        var = jnp.sum(d * d, axis=-1, keepdims=True) * inv_cm1
        return d * jax.lax.rsqrt(var + EPS) * g + b

    def softmax_last(s):
        m = jnp.max(s, axis=-1, keepdims=True)
        e = jnp.exp(s - m)
        return e * pl.reciprocal(jnp.sum(e, axis=-1, keepdims=True), approx=True)

    # ------------------ x = x + GQA(ln1(x)) ------------------
    h1 = layer_norm(x, gamma1, beta1)

    # one lane-dense matmul for all heads: [K | (Q0+Q1) | V]  (queries folded
    # at pack time by linearity)
    kqv = jnp.dot(h1, wqkv_ref[...], preferred_element_type=f32)       # (N, 3C)
    kqv3 = kqv.reshape(Bt, T, 3 * C)

    row = jax.lax.broadcasted_iota(jnp.int32, (T, T), 0)
    col = jax.lax.broadcasted_iota(jnp.int32, (T, T), 1)
    past_mask = (row - col) >= WINDOW_SIZE
    # NOTE: the reference's causal masked_fill is out-of-place and discarded,
    # so no causal mask is applied here either.

    scale = D_HEAD ** -0.5
    head_outs = []
    for h in range(N_HEADS):
        k_h = kqv3[:, :, h * D_HEAD:(h + 1) * D_HEAD]                  # (Bt, T, d)
        q_h = kqv3[:, :, C + h * D_HEAD:C + (h + 1) * D_HEAD]          # (Bt, T, d) == q0+q1
        v_h = kqv3[:, :, 2 * C + h * D_HEAD:2 * C + (h + 1) * D_HEAD]  # (Bt, T, d)
        # torch: query @ keys.view(B, C, T) -- with T == d_head the row-major
        # view is the identity (no transpose): contract q's head dim against
        # k's *token* dim.
        s = jnp.einsum('btj,bjs->bts', q_h, k_h,
                       preferred_element_type=f32) * scale             # (Bt, T, T)
        s = jnp.where(past_mask[None, :, :], -jnp.inf, s)
        w = softmax_last(s)
        # TODO(synk): attention-weight dropout omitted (eval-mode identity).
        head_outs.append(jnp.einsum('bts,bsd->btd', w, v_h,
                                    preferred_element_type=f32))       # (Bt, T, d)
    attn_cat = jnp.concatenate(head_outs, axis=-1).reshape(N, C)       # heads -> lanes
    attn = jnp.dot(attn_cat, wproj_ref[...], preferred_element_type=f32) + b_proj
    # TODO(synk): projection dropout omitted (eval-mode identity).
    x1 = x + attn                                                      # residual

    # ------------------ x = x + Router(ln2(x)) ------------------
    h2 = layer_norm(x1, gamma2, beta2)

    # one matmul: [w1_e0 | w1_e1 | gate (padded to 128 lanes)]
    up = jnp.dot(h2, wupg_ref[...], preferred_element_type=f32) + bupg_ref[...]

    logits = up[:, N_EXPERTS * H:N_EXPERTS * H + N_EXPERTS]            # (N, E)
    top_val = jnp.max(logits, axis=-1, keepdims=True)                  # top-1 value
    eidx = jax.lax.broadcasted_iota(jnp.int32, logits.shape, 1)
    top_ix = jnp.min(jnp.where(logits == top_val, eidx, N_EXPERTS),
                     axis=-1, keepdims=True)                           # first-occurrence argmax
    # faithful to the reference: softmax of the top-1 gate values over the
    # *token* axis (dim=1), done per batch element.
    tv3 = top_val.reshape(Bt, T, 1)
    gm = jnp.max(tv3, axis=1, keepdims=True)
    ge = jnp.exp(tv3 - gm)
    gw3 = ge * pl.reciprocal(jnp.sum(ge, axis=1, keepdims=True), approx=True)
    gate_w = gw3.reshape(N, 1)                                         # (N, 1)

    gated = []
    bias_acc = jnp.zeros((N, C), f32)
    for e in range(N_EXPERTS):
        hh = up[:, e * H:(e + 1) * H]                                  # (N, H)
        # fused [ws_e | wg_e]: one matmul gives swish-input and glu
        sg = jnp.dot(hh, wsg_ref[e], preferred_element_type=f32) + bsg_ref[e]
        s_e = sg[:, :H]
        glu = sg[:, H:]
        beta_e = lnp_ref[_LNP_SBETA:_LNP_SBETA + 1, e:e + 1]           # (1, 1)
        swish = s_e * jax.nn.sigmoid(beta_e * s_e)
        gsel = jnp.where(top_ix == e, gate_w, 0.0)                     # (N, 1)
        gated.append(gsel * (swish * glu))                             # pre-gate before w2
        bias_acc = bias_acc + gsel * lnp_ref[_LNP_B2 + e:_LNP_B2 + e + 1, :]
        # TODO(synk): expert-output dropout omitted (eval-mode identity).
    results = jnp.dot(jnp.concatenate(gated, axis=-1), wdown_ref[...],
                      preferred_element_type=f32) + bias_acc           # stacked w2

    o_ref[...] = (x1 + results).astype(o_ref.dtype)


# ----------------------------------------------------------------------------
# Wrapper
# ----------------------------------------------------------------------------
def _rep_spec(shape):
    zeros = (0,) * len(shape)
    return pl.BlockSpec(shape, lambda b, z=zeros: z)


def moe_block(x, kp, batch_tile=None):
    """x: (B, T, n_embd) float32.  kp: dict of packed kernel params."""
    B, T, C = x.shape
    assert C == N_EMBD and T == BLOCK_SIZE
    # k.view(B, C, T) is only the identity (no transpose) when T == d_head.
    assert T == D_HEAD, "keys.view identity requires T == d_head"
    assert WINDOW_SIZE >= 1, "window must keep the diagonal unmasked"

    if batch_tile is None:
        if B == 1:
            batch_tile = 1
        else:
            # >= 2 grid steps whenever possible (v7x megacore), <= 128 rows/step
            batch_tile = min(16, max(1, B // 2))
            while B % batch_tile:
                batch_tile -= 1
    assert B % batch_tile == 0
    grid = (B // batch_tile,)
    rows = batch_tile * T

    args = [kp["lnp"], kp["w_qkv"], kp["w_proj"], kp["w_upg"], kp["b_upg"],
            kp["wsg"], kp["bsg"], kp["w_down"]]

    in_specs = [pl.BlockSpec((rows, C), lambda b: (b, 0))]
    in_specs += [_rep_spec(a.shape) for a in args]

    out = pl.pallas_call(
        _moe_block_kernel,
        out_shape=jax.ShapeDtypeStruct((B * T, C), x.dtype),
        grid_spec=pltpu.PrefetchScalarGridSpec(
            num_scalar_prefetch=0,
            grid=grid,
            in_specs=in_specs,
            out_specs=pl.BlockSpec((rows, C), lambda b: (b, 0)),
        ),
        compiler_params=pltpu.CompilerParams(
            dimension_semantics=("parallel",),
        ),
    )(x.reshape(B * T, C), *args)
    return out.reshape(B, T, C)


# ----------------------------------------------------------------------------
# Parameters (torch Linear layout: weight (out_features, in_features))
# ----------------------------------------------------------------------------
def init_params(key):
    def linear(k, out_dim, in_dim, bias=True):
        kw, kb = jax.random.split(k)
        lim = 1.0 / (in_dim ** 0.5)
        w = jax.random.uniform(kw, (out_dim, in_dim), jnp.float32, -lim, lim)
        b = jax.random.uniform(kb, (out_dim,), jnp.float32, -lim, lim) if bias else None
        return w, b

    keys = iter(jax.random.split(key, 64))
    p = {}
    p["wk"] = jnp.stack([linear(next(keys), D_HEAD, N_EMBD, bias=False)[0]
                         for _ in range(N_HEADS)])
    p["wq"] = jnp.stack([jnp.stack([linear(next(keys), D_HEAD, N_EMBD, bias=False)[0]
                                    for _ in range(N_Q_HEADS)])
                         for _ in range(N_HEADS)])
    p["wv"] = jnp.stack([linear(next(keys), D_HEAD, N_EMBD, bias=False)[0]
                         for _ in range(N_HEADS)])
    p["w_proj"], p["b_proj"] = linear(next(keys), N_EMBD, N_EMBD)
    # LayerNorms: gamma = ones, beta = zeros, exactly as in the reference module.
    p["gamma1"] = jnp.ones((N_EMBD,), jnp.float32)
    p["beta1"] = jnp.zeros((N_EMBD,), jnp.float32)
    p["gamma2"] = jnp.ones((N_EMBD,), jnp.float32)
    p["beta2"] = jnp.zeros((N_EMBD,), jnp.float32)
    p["w_gate"], p["b_gate"] = linear(next(keys), N_EXPERTS, N_EMBD)
    w1, b1, ws, bs, sb, wg, bg, w2, b2 = [], [], [], [], [], [], [], [], []
    for _ in range(N_EXPERTS):
        a, c = linear(next(keys), N_HIDDEN_EXPERT, N_EMBD); w1.append(a); b1.append(c)
        a, c = linear(next(keys), N_HIDDEN_EXPERT, N_HIDDEN_EXPERT); ws.append(a); bs.append(c)
        sb.append(jax.random.normal(next(keys), (), jnp.float32))
        a, c = linear(next(keys), N_HIDDEN_EXPERT, N_HIDDEN_EXPERT); wg.append(a); bg.append(c)
        a, c = linear(next(keys), N_EMBD, N_HIDDEN_EXPERT); w2.append(a); b2.append(c)
    p["w1"], p["b1"] = jnp.stack(w1), jnp.stack(b1)
    p["ws"], p["bs"] = jnp.stack(ws), jnp.stack(bs)
    p["sbeta"] = jnp.stack(sb)
    p["wg"], p["bg"] = jnp.stack(wg), jnp.stack(bg)
    p["w2"], p["b2"] = jnp.stack(w2), jnp.stack(b2)
    return p


def pack_params(p):
    """Repack torch-layout params into fused, lane-dense, pre-transposed arrays."""
    C, H, E = N_EMBD, N_HIDDEN_EXPERT, N_EXPERTS
    f32 = jnp.float32

    # (6+E, C) slab of small vectors: gammas/betas, b_proj, b2_e, sbeta row.
    sbeta_row = jnp.zeros((C,), f32).at[:E].set(p["sbeta"].reshape(E))
    lnp = jnp.stack([p["gamma1"], p["beta1"], p["gamma2"], p["beta2"], p["b_proj"]]
                    + [p["b2"][e] for e in range(E)] + [sbeta_row])       # (8, C)

    # fused QKV weight: [K | Qsum | V]; the grouped queries are folded since
    # q0@K + q1@K == (q0+q1)@K (exact by linearity).
    blk_k = jnp.concatenate([p["wk"][h].T for h in range(N_HEADS)], axis=1)
    blk_q = jnp.concatenate(
        [sum(p["wq"][h, qi] for qi in range(N_Q_HEADS)).T for h in range(N_HEADS)], axis=1)
    blk_v = jnp.concatenate([p["wv"][h].T for h in range(N_HEADS)], axis=1)
    w_qkv = jnp.concatenate([blk_k, blk_q, blk_v], axis=1)                # (C, 3C)

    w_proj = p["w_proj"].T                                                # (C, C)

    # fused expert up-projection + router gate: [w1_0 | w1_1 | gate_pad128]
    gate_cols = jnp.zeros((C, GATE_PAD), f32).at[:, :E].set(p["w_gate"].T)
    w_upg = jnp.concatenate([p["w1"][e].T for e in range(E)] + [gate_cols], axis=1)
    gate_bias = jnp.zeros((GATE_PAD,), f32).at[:E].set(p["b_gate"])
    b_upg = jnp.concatenate([p["b1"][e] for e in range(E)] + [gate_bias])[None, :]

    # per-expert fused [ws | wg]
    wsg = jnp.stack([jnp.concatenate([p["ws"][e].T, p["wg"][e].T], axis=1)
                     for e in range(E)])                                  # (E, H, 2H)
    bsg = jnp.stack([jnp.concatenate([p["bs"][e], p["bg"][e]])[None, :]
                     for e in range(E)])                                  # (E, 1, 2H)

    # stacked down-projection (experts concatenated along the contraction dim)
    w_down = jnp.concatenate([p["w2"][e].T for e in range(E)], axis=0)    # (E*H, C)

    return dict(lnp=lnp, w_qkv=w_qkv, w_proj=w_proj, w_upg=w_upg, b_upg=b_upg,
                wsg=wsg, bsg=bsg, w_down=w_down)


# ----------------------------------------------------------------------------
# Pure-JAX reference (mirrors the PyTorch forward, including its quirks)
# ----------------------------------------------------------------------------
def moe_block_ref(x, p):
    def layer_norm(v, g, b):
        mean = jnp.mean(v, axis=-1, keepdims=True)
        var = jnp.sum((v - mean) ** 2, axis=-1, keepdims=True) / (v.shape[-1] - 1)
        return (v - mean) / jnp.sqrt(var + EPS) * g + b

    B, T, C = x.shape
    h1 = layer_norm(x, p["gamma1"], p["beta1"])

    row = jnp.arange(T)[:, None]
    col = jnp.arange(T)[None, :]
    past_mask = (row - col) >= WINDOW_SIZE

    head_outs = []
    for h in range(N_HEADS):
        k = h1 @ p["wk"][h].T                   # (B, T, d)
        v = h1 @ p["wv"][h].T
        kv = k.reshape(B, D_HEAD, T)            # torch .view(B, C, T)
        prod = jnp.zeros((B, T, T), jnp.float32)
        for qi in range(N_Q_HEADS):
            q = h1 @ p["wq"][h, qi].T
            prod = prod + jnp.einsum("btd,bds->bts", q, kv)
        scaled = prod * D_HEAD ** -0.5
        # causal masked_fill discarded in the reference; only the past mask applies
        scaled = jnp.where(past_mask, -jnp.inf, scaled)
        w = jax.nn.softmax(scaled, axis=-1)
        head_outs.append(jnp.einsum("bts,bsd->btd", w, v))
    attn = jnp.concatenate(head_outs, axis=-1)
    attn = attn @ p["w_proj"].T + p["b_proj"]
    x1 = x + attn

    h2 = layer_norm(x1, p["gamma2"], p["beta2"])
    logits = h2 @ p["w_gate"].T + p["b_gate"]            # (B, T, E)
    top_val = jnp.max(logits, axis=-1, keepdims=True)    # top-1 (k=1)
    top_ix = jnp.argmax(logits, axis=-1)                 # (B, T)
    gate_w = jax.nn.softmax(top_val, axis=1)             # softmax over token axis (dim=1)

    results = jnp.zeros_like(h2)
    for e in range(N_EXPERTS):
        hh = h2 @ p["w1"][e].T + p["b1"][e]
        s = hh @ p["ws"][e].T + p["bs"][e]
        swish = s * jax.nn.sigmoid(p["sbeta"][e] * s)
        glu = hh @ p["wg"][e].T + p["bg"][e]
        eo = (swish * glu) @ p["w2"][e].T + p["b2"][e]
        sel = (top_ix == e).astype(x.dtype)[..., None]
        results = results + sel * gate_w * eo
    return x1 + results


# ----------------------------------------------------------------------------
if __name__ == "__main__":
    key = jax.random.PRNGKey(0)
    kx, kp_key = jax.random.split(key)

    params = init_params(kp_key)
    kparams = pack_params(params)

    # small shape implied by the module: batch=2, seq=block_size=8, n_embd=32
    x = jax.random.normal(kx, (2, BLOCK_SIZE, N_EMBD), dtype=jnp.float32)
    y = jax.block_until_ready(moe_block(x, kparams))
    ref = moe_block_ref(x, params)
    assert jnp.allclose(y, ref, atol=1e-3, rtol=1e-3), float(jnp.max(jnp.abs(y - ref)))

    # also exercise the multi-batch-per-grid-step path (batch_tile > 1)
    x8 = jax.random.normal(jax.random.PRNGKey(1), (8, BLOCK_SIZE, N_EMBD),
                           dtype=jnp.float32)
    y8 = jax.block_until_ready(moe_block(x8, kparams))
    ref8 = moe_block_ref(x8, params)
    assert jnp.allclose(y8, ref8, atol=1e-3, rtol=1e-3), float(jnp.max(jnp.abs(y8 - ref8)))

    print("KERNEL_OK")
</pallas_src>

<mosaic_0001>
module attributes {stable_mosaic.version = 11 : i64} {
  func.func @_moe_block_kernel(%arg0: i32, %arg1: memref<8x32xf32, #tpu.memory_space<vmem>>, %arg2: memref<8x32xf32, #tpu.memory_space<vmem>>, %arg3: memref<32x96xf32, #tpu.memory_space<vmem>>, %arg4: memref<32x32xf32, #tpu.memory_space<vmem>>, %arg5: memref<32x384xf32, #tpu.memory_space<vmem>>, %arg6: memref<1x384xf32, #tpu.memory_space<vmem>>, %arg7: memref<2x128x256xf32, #tpu.memory_space<vmem>>, %arg8: memref<2x1x256xf32, #tpu.memory_space<vmem>>, %arg9: memref<256x32xf32, #tpu.memory_space<vmem>>, %arg10: memref<8x32xf32, #tpu.memory_space<vmem>>) attributes {dimension_semantics = [#tpu.dimension_semantics<parallel>], iteration_bounds = array<i64: 2>, scalar_prefetch = 0 : i64, scratch_operands = 0 : i64, tpu.core_type = #tpu.core_type<tc>, window_params = [{transform_indices = @transform_0, window_bounds = array<i64: 8, 32>}, {pipeline_mode = #tpu.pipeline_mode<synchronous>, transform_indices = @transform_1, window_bounds = array<i64: 8, 32>}, {pipeline_mode = #tpu.pipeline_mode<synchronous>, transform_indices = @transform_2, window_bounds = array<i64: 32, 96>}, {pipeline_mode = #tpu.pipeline_mode<synchronous>, transform_indices = @transform_3, window_bounds = array<i64: 32, 32>}, {pipeline_mode = #tpu.pipeline_mode<synchronous>, transform_indices = @transform_4, window_bounds = array<i64: 32, 384>}, {pipeline_mode = #tpu.pipeline_mode<synchronous>, transform_indices = @transform_5, window_bounds = array<i64: 1, 384>}, {pipeline_mode = #tpu.pipeline_mode<synchronous>, transform_indices = @transform_6, window_bounds = array<i64: 2, 128, 256>}, {pipeline_mode = #tpu.pipeline_mode<synchronous>, transform_indices = @transform_7, window_bounds = array<i64: 2, 1, 256>}, {pipeline_mode = #tpu.pipeline_mode<synchronous>, transform_indices = @transform_8, window_bounds = array<i64: 256, 32>}, {transform_indices = @transform_9, window_bounds = array<i64: 8, 32>}]} {
    %c0 = arith.constant 0 : index
    %c0_0 = arith.constant 0 : index
    %0 = vector.load %arg1[%c0, %c0_0] : memref<8x32xf32, #tpu.memory_space<vmem>>, vector<8x32xf32>
    %c0_1 = arith.constant 0 : index
    %c0_2 = arith.constant 0 : index
    %1 = vector.load %arg2[%c0_1, %c0_2] : memref<8x32xf32, #tpu.memory_space<vmem>>, vector<1x32xf32>
    %c1 = arith.constant 1 : index
    %c0_3 = arith.constant 0 : index
    %2 = vector.load %arg2[%c1, %c0_3] : memref<8x32xf32, #tpu.memory_space<vmem>>, vector<1x32xf32>
    %c2 = arith.constant 2 : index
    %c0_4 = arith.constant 0 : index
    %3 = vector.load %arg2[%c2, %c0_4] : memref<8x32xf32, #tpu.memory_space<vmem>>, vector<1x32xf32>
    %c3 = arith.constant 3 : index
    %c0_5 = arith.constant 0 : index
    %4 = vector.load %arg2[%c3, %c0_5] : memref<8x32xf32, #tpu.memory_space<vmem>>, vector<1x32xf32>
    %c4 = arith.constant 4 : index
    %c0_6 = arith.constant 0 : index
    %5 = vector.load %arg2[%c4, %c0_6] : memref<8x32xf32, #tpu.memory_space<vmem>>, vector<1x32xf32>
    %cst = arith.constant dense<0.000000e+00> : vector<8xf32>
    %6 = vector.multi_reduction <add>, %0, %cst [1] : vector<8x32xf32> to vector<8xf32>
    %7 = vector.shape_cast %6 : vector<8xf32> to vector<8x1xf32>
    %cst_7 = arith.constant 3.125000e-02 : f32
    %8 = vector.broadcast %cst_7 : f32 to vector<8x1xf32>
    %9 = arith.mulf %7, %8 : vector<8x1xf32>
    %10 = vector.broadcast %9 : vector<8x1xf32> to vector<8x32xf32>
    %11 = arith.subf %0, %10 : vector<8x32xf32>
    %12 = arith.mulf %11, %11 : vector<8x32xf32>
    %cst_8 = arith.constant dense<0.000000e+00> : vector<8xf32>
    %13 = vector.multi_reduction <add>, %12, %cst_8 [1] : vector<8x32xf32> to vector<8xf32>
    %14 = vector.shape_cast %13 : vector<8xf32> to vector<8x1xf32>
    %cst_9 = arith.constant 0.0322580636 : f32
    %15 = vector.broadcast %cst_9 : f32 to vector<8x1xf32>
    %16 = arith.mulf %14, %15 : vector<8x1xf32>
    %cst_10 = arith.constant 9.99999974E-6 : f32
    %17 = vector.broadcast %cst_10 : f32 to vector<8x1xf32>
    %18 = arith.addf %16, %17 : vector<8x1xf32>
    %19 = math.rsqrt %18 : vector<8x1xf32>
    %20 = vector.broadcast %19 : vector<8x1xf32> to vector<8x32xf32>
    %21 = arith.mulf %11, %20 : vector<8x32xf32>
    %22 = vector.broadcast %1 : vector<1x32xf32> to vector<8x32xf32>
    %23 = arith.mulf %21, %22 : vector<8x32xf32>
    %24 = vector.broadcast %2 : vector<1x32xf32> to vector<8x32xf32>
    %25 = arith.addf %23, %24 : vector<8x32xf32>
    %c0_11 = arith.constant 0 : index
    %c0_12 = arith.constant 0 : index
    %26 = vector.load %arg3[%c0_11, %c0_12] : memref<32x96xf32, #tpu.memory_space<vmem>>, vector<32x96xf32>
    %cst_13 = arith.constant dense<0.000000e+00> : vector<8x96xf32>
    %27 = tpu.matmul %25, %26, %cst_13 {dimension_numbers = #tpu.dot_dimension_numbers<[1], [0], [0], [1], [0, 0, 1, 1], [], []>} : vector<8x32xf32>, vector<32x96xf32>, vector<8x96xf32> -> vector<8x96xf32>
    %28 = vector.shape_cast %27 : vector<8x96xf32> to vector<1x8x96xf32>
    %29 = tpu.iota {dimensions = array<i32: 0>} : vector<8x8xi32>
    %30 = tpu.iota {dimensions = array<i32: 1>} : vector<8x8xi32>
    %31 = arith.subi %29, %30 : vector<8x8xi32>
    %c3_i32 = arith.constant 3 : i32
    %32 = vector.broadcast %c3_i32 : i32 to vector<8x8xi32>
    %33 = arith.cmpi sge, %31, %32 : vector<8x8xi32>
    %34 = vector.extract_strided_slice %28 {offsets = [0, 0, 0], sizes = [1, 8, 8], strides = [1, 1, 1]} : vector<1x8x96xf32> to vector<1x8x8xf32>
    %35 = vector.extract_strided_slice %28 {offsets = [0, 0, 32], sizes = [1, 8, 8], strides = [1, 1, 1]} : vector<1x8x96xf32> to vector<1x8x8xf32>
    %36 = vector.extract_strided_slice %28 {offsets = [0, 0, 64], sizes = [1, 8, 8], strides = [1, 1, 1]} : vector<1x8x96xf32> to vector<1x8x8xf32>
    "tpu.trace_start"() <{level = 10 : i32, message = "btj,bjs->bts"}> : () -> ()
    %cst_14 = arith.constant dense<0.000000e+00> : vector<1x8x8xf32>
    %37 = tpu.matmul %35, %34, %cst_14 {dimension_numbers = #tpu.dot_dimension_numbers<[2], [1], [1], [2], [0, 0, 0, 1, 1, 2], [0], [0]>} : vector<1x8x8xf32>, vector<1x8x8xf32>, vector<1x8x8xf32> -> vector<1x8x8xf32>
    "tpu.trace_stop"() : () -> ()
    %cst_15 = arith.constant 0.353553385 : f32
    %38 = vector.broadcast %cst_15 : f32 to vector<1x8x8xf32>
    %39 = arith.mulf %37, %38 : vector<1x8x8xf32>
    %40 = vector.shape_cast %33 : vector<8x8xi1> to vector<1x8x8xi1>
    %cst_16 = arith.constant 0xFF800000 : f32
    %41 = vector.broadcast %cst_16 : f32 to vector<1x8x8xf32>
    %42 = arith.select %40, %41, %39 : vector<1x8x8xi1>, vector<1x8x8xf32>
    %cst_17 = arith.constant dense<0xFF800000> : vector<1x8xf32>
    %43 = vector.multi_reduction <maximumf>, %42, %cst_17 [2] : vector<1x8x8xf32> to vector<1x8xf32>
    %44 = vector.shape_cast %43 : vector<1x8xf32> to vector<1x8x1xf32>
    %45 = vector.broadcast %44 : vector<1x8x1xf32> to vector<1x8x8xf32>
    %46 = arith.subf %42, %45 : vector<1x8x8xf32>
    %47 = math.exp %46 : vector<1x8x8xf32>
    %cst_18 = arith.constant dense<0.000000e+00> : vector<1x8xf32>
    %48 = vector.multi_reduction <add>, %47, %cst_18 [2] : vector<1x8x8xf32> to vector<1x8xf32>
    %49 = vector.shape_cast %48 : vector<1x8xf32> to vector<1x8x1xf32>
    %50 = tpu.reciprocal %49 {approx = true} : vector<1x8x1xf32> -> vector<1x8x1xf32>
    %51 = vector.broadcast %50 : vector<1x8x1xf32> to vector<1x8x8xf32>
    %52 = arith.mulf %47, %51 : vector<1x8x8xf32>
    "tpu.trace_start"() <{level = 10 : i32, message = "bts,bsd->btd"}> : () -> ()
    %cst_19 = arith.constant dense<0.000000e+00> : vector<1x8x8xf32>
    %53 = tpu.matmul %52, %36, %cst_19 {dimension_numbers = #tpu.dot_dimension_numbers<[2], [1], [1], [2], [0, 0, 0, 1, 1, 2], [0], [0]>} : vector<1x8x8xf32>, vector<1x8x8xf32>, vector<1x8x8xf32> -> vector<1x8x8xf32>
    "tpu.trace_stop"() : () -> ()
    %54 = vector.extract_strided_slice %28 {offsets = [0, 0, 8], sizes = [1, 8, 8], strides = [1, 1, 1]} : vector<1x8x96xf32> to vector<1x8x8xf32>
    %55 = vector.extract_strided_slice %28 {offsets = [0, 0, 40], sizes = [1, 8, 8], strides = [1, 1, 1]} : vector<1x8x96xf32> to vector<1x8x8xf32>
    %56 = vector.extract_strided_slice %28 {offsets = [0, 0, 72], sizes = [1, 8, 8], strides = [1, 1, 1]} : vector<1x8x96xf32> to vector<1x8x8xf32>
    "tpu.trace_start"() <{level = 10 : i32, message = "btj,bjs->bts"}> : () -> ()
    %cst_20 = arith.constant dense<0.000000e+00> : vector<1x8x8xf32>
    %57 = tpu.matmul %55, %54, %cst_20 {dimension_numbers = #tpu.dot_dimension_numbers<[2], [1], [1], [2], [0, 0, 0, 1, 1, 2], [0], [0]>} : vector<1x8x8xf32>, vector<1x8x8xf32>, vector<1x8x8xf32> -> vector<1x8x8xf32>
    "tpu.trace_stop"() : () -> ()
    %cst_21 = arith.constant 0.353553385 : f32
    %58 = vector.broadcast %cst_21 : f32 to vector<1x8x8xf32>
    %59 = arith.mulf %57, %58 : vector<1x8x8xf32>
    %60 = vector.shape_cast %33 : vector<8x8xi1> to vector<1x8x8xi1>
    %cst_22 = arith.constant 0xFF800000 : f32
    %61 = vector.broadcast %cst_22 : f32 to vector<1x8x8xf32>
    %62 = arith.select %60, %61, %59 : vector<1x8x8xi1>, vector<1x8x8xf32>
    %cst_23 = arith.constant dense<0xFF800000> : vector<1x8xf32>
    %63 = vector.multi_reduction <maximumf>, %62, %cst_23 [2] : vector<1x8x8xf32> to vector<1x8xf32>
    %64 = vector.shape_cast %63 : vector<1x8xf32> to vector<1x8x1xf32>
    %65 = vector.broadcast %64 : vector<1x8x1xf32> to vector<1x8x8xf32>
    %66 = arith.subf %62, %65 : vector<1x8x8xf32>
    %67 = math.exp %66 : vector<1x8x8xf32>
    %cst_24 = arith.constant dense<0.000000e+00> : vector<1x8xf32>
    %68 = vector.multi_reduction <add>, %67, %cst_24 [2] : vector<1x8x8xf32> to vector<1x8xf32>
    %69 = vector.shape_cast %68 : vector<1x8xf32> to vector<1x8x1xf32>
    %70 = tpu.reciprocal %69 {approx = true} : vector<1x8x1xf32> -> vector<1x8x1xf32>
    %71 = vector.broadcast %70 : vector<1x8x1xf32> to vector<1x8x8xf32>
    %72 = arith.mulf %67, %71 : vector<1x8x8xf32>
    "tpu.trace_start"() <{level = 10 : i32, message = "bts,bsd->btd"}> : () -> ()
    %cst_25 = arith.constant dense<0.000000e+00> : vector<1x8x8xf32>
    %73 = tpu.matmul %72, %56, %cst_25 {dimension_numbers = #tpu.dot_dimension_numbers<[2], [1], [1], [2], [0, 0, 0, 1, 1, 2], [0], [0]>} : vector<1x8x8xf32>, vector<1x8x8xf32>, vector<1x8x8xf32> -> vector<1x8x8xf32>
    "tpu.trace_stop"() : () -> ()
    %74 = vector.extract_strided_slice %28 {offsets = [0, 0, 16], sizes = [1, 8, 8], strides = [1, 1, 1]} : vector<1x8x96xf32> to vector<1x8x8xf32>
    %75 = vector.extract_strided_slice %28 {offsets = [0, 0, 48], sizes = [1, 8, 8], strides = [1, 1, 1]} : vector<1x8x96xf32> to vector<1x8x8xf32>
    %76 = vector.extract_strided_slice %28 {offsets = [0, 0, 80], sizes = [1, 8, 8], strides = [1, 1, 1]} : vector<1x8x96xf32> to vector<1x8x8xf32>
    "tpu.trace_start"() <{level = 10 : i32, message = "btj,bjs->bts"}> : () -> ()
    %cst_26 = arith.constant dense<0.000000e+00> : vector<1x8x8xf32>
    %77 = tpu.matmul %75, %74, %cst_26 {dimension_numbers = #tpu.dot_dimension_numbers<[2], [1], [1], [2], [0, 0, 0, 1, 1, 2], [0], [0]>} : vector<1x8x8xf32>, vector<1x8x8xf32>, vector<1x8x8xf32> -> vector<1x8x8xf32>
    "tpu.trace_stop"() : () -> ()
    %cst_27 = arith.constant 0.353553385 : f32
    %78 = vector.broadcast %cst_27 : f32 to vector<1x8x8xf32>
    %79 = arith.mulf %77, %78 : vector<1x8x8xf32>
    %80 = vector.shape_cast %33 : vector<8x8xi1> to vector<1x8x8xi1>
    %cst_28 = arith.constant 0xFF800000 : f32
    %81 = vector.broadcast %cst_28 : f32 to vector<1x8x8xf32>
    %82 = arith.select %80, %81, %79 : vector<1x8x8xi1>, vector<1x8x8xf32>
    %cst_29 = arith.constant dense<0xFF800000> : vector<1x8xf32>
    %83 = vector.multi_reduction <maximumf>, %82, %cst_29 [2] : vector<1x8x8xf32> to vector<1x8xf32>
    %84 = vector.shape_cast %83 : vector<1x8xf32> to vector<1x8x1xf32>
    %85 = vector.broadcast %84 : vector<1x8x1xf32> to vector<1x8x8xf32>
    %86 = arith.subf %82, %85 : vector<1x8x8xf32>
    %87 = math.exp %86 : vector<1x8x8xf32>
    %cst_30 = arith.constant dense<0.000000e+00> : vector<1x8xf32>
    %88 = vector.multi_reduction <add>, %87, %cst_30 [2] : vector<1x8x8xf32> to vector<1x8xf32>
    %89 = vector.shape_cast %88 : vector<1x8xf32> to vector<1x8x1xf32>
    %90 = tpu.reciprocal %89 {approx = true} : vector<1x8x1xf32> -> vector<1x8x1xf32>
    %91 = vector.broadcast %90 : vector<1x8x1xf32> to vector<1x8x8xf32>
    %92 = arith.mulf %87, %91 : vector<1x8x8xf32>
    "tpu.trace_start"() <{level = 10 : i32, message = "bts,bsd->btd"}> : () -> ()
    %cst_31 = arith.constant dense<0.000000e+00> : vector<1x8x8xf32>
    %93 = tpu.matmul %92, %76, %cst_31 {dimension_numbers = #tpu.dot_dimension_numbers<[2], [1], [1], [2], [0, 0, 0, 1, 1, 2], [0], [0]>} : vector<1x8x8xf32>, vector<1x8x8xf32>, vector<1x8x8xf32> -> vector<1x8x8xf32>
    "tpu.trace_stop"() : () -> ()
    %94 = vector.extract_strided_slice %28 {offsets = [0, 0, 24], sizes = [1, 8, 8], strides = [1, 1, 1]} : vector<1x8x96xf32> to vector<1x8x8xf32>
    %95 = vector.extract_strided_slice %28 {offsets = [0, 0, 56], sizes = [1, 8, 8], strides = [1, 1, 1]} : vector<1x8x96xf32> to vector<1x8x8xf32>
    %96 = vector.extract_strided_slice %28 {offsets = [0, 0, 88], sizes = [1, 8, 8], strides = [1, 1, 1]} : vector<1x8x96xf32> to vector<1x8x8xf32>
    "tpu.trace_start"() <{level = 10 : i32, message = "btj,bjs->bts"}> : () -> ()
    %cst_32 = arith.constant dense<0.000000e+00> : vector<1x8x8xf32>
    %97 = tpu.matmul %95, %94, %cst_32 {dimension_numbers = #tpu.dot_dimension_numbers<[2], [1], [1], [2], [0, 0, 0, 1, 1, 2], [0], [0]>} : vector<1x8x8xf32>, vector<1x8x8xf32>, vector<1x8x8xf32> -> vector<1x8x8xf32>
    "tpu.trace_stop"() : () -> ()
    %cst_33 = arith.constant 0.353553385 : f32
    %98 = vector.broadcast %cst_33 : f32 to vector<1x8x8xf32>
    %99 = arith.mulf %97, %98 : vector<1x8x8xf32>
    %100 = vector.shape_cast %33 : vector<8x8xi1> to vector<1x8x8xi1>
    %cst_34 = arith.constant 0xFF800000 : f32
    %101 = vector.broadcast %cst_34 : f32 to vector<1x8x8xf32>
    %102 = arith.select %100, %101, %99 : vector<1x8x8xi1>, vector<1x8x8xf32>
    %cst_35 = arith.constant dense<0xFF800000> : vector<1x8xf32>
    %103 = vector.multi_reduction <maximumf>, %102, %cst_35 [2] : vector<1x8x8xf32> to vector<1x8xf32>
    %104 = vector.shape_cast %103 : vector<1x8xf32> to vector<1x8x1xf32>
    %105 = vector.broadcast %104 : vector<1x8x1xf32> to vector<1x8x8xf32>
    %106 = arith.subf %102, %105 : vector<1x8x8xf32>
    %107 = math.exp %106 : vector<1x8x8xf32>
    %cst_36 = arith.constant dense<0.000000e+00> : vector<1x8xf32>
    %108 = vector.multi_reduction <add>, %107, %cst_36 [2] : vector<1x8x8xf32> to vector<1x8xf32>
    %109 = vector.shape_cast %108 : vector<1x8xf32> to vector<1x8x1xf32>
    %110 = tpu.reciprocal %109 {approx = true} : vector<1x8x1xf32> -> vector<1x8x1xf32>
    %111 = vector.broadcast %110 : vector<1x8x1xf32> to vector<1x8x8xf32>
    %112 = arith.mulf %107, %111 : vector<1x8x8xf32>
    "tpu.trace_start"() <{level = 10 : i32, message = "bts,bsd->btd"}> : () -> ()
    %cst_37 = arith.constant dense<0.000000e+00> : vector<1x8x8xf32>
    %113 = tpu.matmul %112, %96, %cst_37 {dimension_numbers = #tpu.dot_dimension_numbers<[2], [1], [1], [2], [0, 0, 0, 1, 1, 2], [0], [0]>} : vector<1x8x8xf32>, vector<1x8x8xf32>, vector<1x8x8xf32> -> vector<1x8x8xf32>
    "tpu.trace_stop"() : () -> ()
    %114 = tpu.concatenate %53, %73, %93, %113 in 2 : vector<1x8x8xf32>, vector<1x8x8xf32>, vector<1x8x8xf32>, vector<1x8x8xf32> -> vector<1x8x32xf32>
    %115 = vector.shape_cast %114 : vector<1x8x32xf32> to vector<8x32xf32>
    %c0_38 = arith.constant 0 : index
    %c0_39 = arith.constant 0 : index
    %116 = vector.load %arg4[%c0_38, %c0_39] : memref<32x32xf32, #tpu.memory_space<vmem>>, vector<32x32xf32>
    %cst_40 = arith.constant dense<0.000000e+00> : vector<8x32xf32>
    %117 = tpu.matmul %115, %116, %cst_40 {dimension_numbers = #tpu.dot_dimension_numbers<[1], [0], [0], [1], [0, 0, 1, 1], [], []>} : vector<8x32xf32>, vector<32x32xf32>, vector<8x32xf32> -> vector<8x32xf32>
    %118 = vector.broadcast %5 : vector<1x32xf32> to vector<8x32xf32>
    %119 = arith.addf %117, %118 : vector<8x32xf32>
    %120 = arith.addf %0, %119 : vector<8x32xf32>
    %cst_41 = arith.constant dense<0.000000e+00> : vector<8xf32>
    %121 = vector.multi_reduction <add>, %120, %cst_41 [1] : vector<8x32xf32> to vector<8xf32>
    %122 = vector.shape_cast %121 : vector<8xf32> to vector<8x1xf32>
    %cst_42 = arith.constant 3.125000e-02 : f32
    %123 = vector.broadcast %cst_42 : f32 to vector<8x1xf32>
    %124 = arith.mulf %122, %123 : vector<8x1xf32>
    %125 = vector.broadcast %124 : vector<8x1xf32> to vector<8x32xf32>
    %126 = arith.subf %120, %125 : vector<8x32xf32>
    %127 = arith.mulf %126, %126 : vector<8x32xf32>
    %cst_43 = arith.constant dense<0.000000e+00> : vector<8xf32>
    %128 = vector.multi_reduction <add>, %127, %cst_43 [1] : vector<8x32xf32> to vector<8xf32>
    %129 = vector.shape_cast %128 : vector<8xf32> to vector<8x1xf32>
    %cst_44 = arith.constant 0.0322580636 : f32
    %130 = vector.broadcast %cst_44 : f32 to vector<8x1xf32>
    %131 = arith.mulf %129, %130 : vector<8x1xf32>
    %cst_45 = arith.constant 9.99999974E-6 : f32
    %132 = vector.broadcast %cst_45 : f32 to vector<8x1xf32>
    %133 = arith.addf %131, %132 : vector<8x1xf32>
    %134 = math.rsqrt %133 : vector<8x1xf32>
    %135 = vector.broadcast %134 : vector<8x1xf32> to vector<8x32xf32>
    %136 = arith.mulf %126, %135 : vector<8x32xf32>
    %137 = vector.broadcast %3 : vector<1x32xf32> to vector<8x32xf32>
    %138 = arith.mulf %136, %137 : vector<8x32xf32>
    %139 = vector.broadcast %4 : vector<1x32xf32> to vector<8x32xf32>
    %140 = arith.addf %138, %139 : vector<8x32xf32>
    %c0_46 = arith.constant 0 : index
    %c0_47 = arith.constant 0 : index
    %141 = vector.load %arg5[%c0_46, %c0_47] : memref<32x384xf32, #tpu.memory_space<vmem>>, vector<32x384xf32>
    %cst_48 = arith.constant dense<0.000000e+00> : vector<8x384xf32>
    %142 = tpu.matmul %140, %141, %cst_48 {dimension_numbers = #tpu.dot_dimension_numbers<[1], [0], [0], [1], [0, 0, 1, 1], [], []>} : vector<8x32xf32>, vector<32x384xf32>, vector<8x384xf32> -> vector<8x384xf32>
    %c0_49 = arith.constant 0 : index
    %c0_50 = arith.constant 0 : index
    %143 = vector.load %arg6[%c0_49, %c0_50] : memref<1x384xf32, #tpu.memory_space<vmem>>, vector<1x384xf32>
    %144 = vector.broadcast %143 : vector<1x384xf32> to vector<8x384xf32>
    %145 = arith.addf %142, %144 : vector<8x384xf32>
    %146 = vector.extract_strided_slice %145 {offsets = [0, 256], sizes = [8, 2], strides = [1, 1]} : vector<8x384xf32> to vector<8x2xf32>
    %cst_51 = arith.constant dense<0xFF800000> : vector<8xf32>
    %147 = vector.multi_reduction <maximumf>, %146, %cst_51 [1] : vector<8x2xf32> to vector<8xf32>
    %148 = vector.shape_cast %147 : vector<8xf32> to vector<8x1xf32>
    %149 = tpu.iota {dimensions = array<i32: 1>} : vector<8x2xi32>
    %150 = vector.broadcast %148 : vector<8x1xf32> to vector<8x2xf32>
    %151 = arith.cmpf oeq, %146, %150 : vector<8x2xf32>
    %c2_i32 = arith.constant 2 : i32
    %152 = vector.broadcast %c2_i32 : i32 to vector<8x2xi32>
    %153 = arith.select %151, %149, %152 : vector<8x2xi1>, vector<8x2xi32>
    %cst_52 = arith.constant dense<2147483647> : vector<8xi32>
    %154 = vector.multi_reduction <minsi>, %153, %cst_52 [1] : vector<8x2xi32> to vector<8xi32>
    %155 = vector.shape_cast %154 : vector<8xi32> to vector<8x1xi32>
    %156 = vector.shape_cast %148 : vector<8x1xf32> to vector<1x8x1xf32>
    %cst_53 = arith.constant dense<0xFF800000> : vector<1x1xf32>
    %157 = vector.multi_reduction <maximumf>, %156, %cst_53 [1] : vector<1x8x1xf32> to vector<1x1xf32>
    %158 = vector.shape_cast %157 : vector<1x1xf32> to vector<1x1x1xf32>
    %159 = vector.broadcast %158 : vector<1x1x1xf32> to vector<1x8x1xf32>
    %160 = arith.subf %156, %159 : vector<1x8x1xf32>
    %161 = math.exp %160 : vector<1x8x1xf32>
    %cst_54 = arith.constant dense<0.000000e+00> : vector<1x1xf32>
    %162 = vector.multi_reduction <add>, %161, %cst_54 [1] : vector<1x8x1xf32> to vector<1x1xf32>
    %163 = vector.shape_cast %162 : vector<1x1xf32> to vector<1x1x1xf32>
    %164 = tpu.reciprocal %163 {approx = true} : vector<1x1x1xf32> -> vector<1x1x1xf32>
    %165 = vector.broadcast %164 : vector<1x1x1xf32> to vector<1x8x1xf32>
    %166 = arith.mulf %161, %165 : vector<1x8x1xf32>
    %167 = vector.shape_cast %166 : vector<1x8x1xf32> to vector<8x1xf32>
    %cst_55 = arith.constant 0.000000e+00 : f32
    %168 = vector.broadcast %cst_55 : f32 to vector<8x32xf32>
    %169 = vector.extract_strided_slice %145 {offsets = [0, 0], sizes = [8, 128], strides = [1, 1]} : vector<8x384xf32> to vector<8x128xf32>
    %c0_56 = arith.constant 0 : index
    %c0_57 = arith.constant 0 : index
    %c0_58 = arith.constant 0 : index
    %170 = vector.load %arg7[%c0_56, %c0_57, %c0_58] : memref<2x128x256xf32, #tpu.memory_space<vmem>>, vector<1x128x256xf32>
    %171 = vector.shape_cast %170 : vector<1x128x256xf32> to vector<128x256xf32>
    %cst_59 = arith.constant dense<0.000000e+00> : vector<8x256xf32>
    %172 = tpu.matmul %169, %171, %cst_59 {dimension_numbers = #tpu.dot_dimension_numbers<[1], [0], [0], [1], [0, 0, 1, 1], [], []>} : vector<8x128xf32>, vector<128x256xf32>, vector<8x256xf32> -> vector<8x256xf32>
    %c0_60 = arith.constant 0 : index
    %c0_61 = arith.constant 0 : index
    %c0_62 = arith.constant 0 : index
    %173 = vector.load %arg8[%c0_60, %c0_61, %c0_62] : memref<2x1x256xf32, #tpu.memory_space<vmem>>, vector<1x1x256xf32>
    %174 = vector.shape_cast %173 : vector<1x1x256xf32> to vector<1x256xf32>
    %175 = vector.broadcast %174 : vector<1x256xf32> to vector<8x256xf32>
    %176 = arith.addf %172, %175 : vector<8x256xf32>
    %177 = vector.extract_strided_slice %176 {offsets = [0, 0], sizes = [8, 128], strides = [1, 1]} : vector<8x256xf32> to vector<8x128xf32>
    %178 = vector.extract_strided_slice %176 {offsets = [0, 128], sizes = [8, 128], strides = [1, 1]} : vector<8x256xf32> to vector<8x128xf32>
    %c7 = arith.constant 7 : index
    %c0_63 = arith.constant 0 : index
    %179 = vector.load %arg2[%c7, %c0_63] : memref<8x32xf32, #tpu.memory_space<vmem>>, vector<1x1xf32>
    %180 = vector.broadcast %179 : vector<1x1xf32> to vector<8x128xf32>
    %181 = arith.mulf %180, %177 : vector<8x128xf32>
    %182 = arith.negf %181 : vector<8x128xf32>
    %183 = math.exp %182 : vector<8x128xf32>
    %cst_64 = arith.constant 1.000000e+00 : f32
    %184 = vector.broadcast %cst_64 : f32 to vector<8x128xf32>
    %185 = arith.addf %184, %183 : vector<8x128xf32>
    %186 = arith.divf %184, %185 : vector<8x128xf32>
    %187 = arith.mulf %177, %186 : vector<8x128xf32>
    %c0_i32 = arith.constant 0 : i32
    %188 = vector.broadcast %c0_i32 : i32 to vector<8x1xi32>
    %189 = arith.cmpi eq, %155, %188 : vector<8x1xi32>
    %cst_65 = arith.constant 0.000000e+00 : f32
    %190 = vector.broadcast %cst_65 : f32 to vector<8x1xf32>
    %191 = arith.select %189, %167, %190 : vector<8x1xi1>, vector<8x1xf32>
    %192 = arith.mulf %187, %178 : vector<8x128xf32>
    %193 = vector.broadcast %191 : vector<8x1xf32> to vector<8x128xf32>
    %194 = arith.mulf %193, %192 : vector<8x128xf32>
    %c5 = arith.constant 5 : index
    %c0_66 = arith.constant 0 : index
    %195 = vector.load %arg2[%c5, %c0_66] : memref<8x32xf32, #tpu.memory_space<vmem>>, vector<1x32xf32>
    %196 = vector.broadcast %191 : vector<8x1xf32> to vector<8x32xf32>
    %197 = vector.broadcast %195 : vector<1x32xf32> to vector<8x32xf32>
    %198 = arith.mulf %196, %197 : vector<8x32xf32>
    %199 = arith.addf %168, %198 : vector<8x32xf32>
    %200 = vector.extract_strided_slice %145 {offsets = [0, 128], sizes = [8, 128], strides = [1, 1]} : vector<8x384xf32> to vector<8x128xf32>
    %c1_67 = arith.constant 1 : index
    %c0_68 = arith.constant 0 : index
    %c0_69 = arith.constant 0 : index
    %201 = vector.load %arg7[%c1_67, %c0_68, %c0_69] : memref<2x128x256xf32, #tpu.memory_space<vmem>>, vector<1x128x256xf32>
    %202 = vector.shape_cast %201 : vector<1x128x256xf32> to vector<128x256xf32>
    %cst_70 = arith.constant dense<0.000000e+00> : vector<8x256xf32>
    %203 = tpu.matmul %200, %202, %cst_70 {dimension_numbers = #tpu.dot_dimension_numbers<[1], [0], [0], [1], [0, 0, 1, 1], [], []>} : vector<8x128xf32>, vector<128x256xf32>, vector<8x256xf32> -> vector<8x256xf32>
    %c1_71 = arith.constant 1 : index
    %c0_72 = arith.constant 0 : index
    %c0_73 = arith.constant 0 : index
    %204 = vector.load %arg8[%c1_71, %c0_72, %c0_73] : memref<2x1x256xf32, #tpu.memory_space<vmem>>, vector<1x1x256xf32>
    %205 = vector.shape_cast %204 : vector<1x1x256xf32> to vector<1x256xf32>
    %206 = vector.broadcast %205 : vector<1x256xf32> to vector<8x256xf32>
    %207 = arith.addf %203, %206 : vector<8x256xf32>
    %208 = vector.extract_strided_slice %207 {offsets = [0, 0], sizes = [8, 128], strides = [1, 1]} : vector<8x256xf32> to vector<8x128xf32>
    %209 = vector.extract_strided_slice %207 {offsets = [0, 128], sizes = [8, 128], strides = [1, 1]} : vector<8x256xf32> to vector<8x128xf32>
    %c7_74 = arith.constant 7 : index
    %c1_75 = arith.constant 1 : index
    %210 = vector.load %arg2[%c7_74, %c1_75] : memref<8x32xf32, #tpu.memory_space<vmem>>, vector<1x1xf32>
    %211 = vector.broadcast %210 : vector<1x1xf32> to vector<8x128xf32>
    %212 = arith.mulf %211, %208 : vector<8x128xf32>
    %213 = arith.negf %212 : vector<8x128xf32>
    %214 = math.exp %213 : vector<8x128xf32>
    %cst_76 = arith.constant 1.000000e+00 : f32
    %215 = vector.broadcast %cst_76 : f32 to vector<8x128xf32>
    %216 = arith.addf %215, %214 : vector<8x128xf32>
    %217 = arith.divf %215, %216 : vector<8x128xf32>
    %218 = arith.mulf %208, %217 : vector<8x128xf32>
    %c1_i32 = arith.constant 1 : i32
    %219 = vector.broadcast %c1_i32 : i32 to vector<8x1xi32>
    %220 = arith.cmpi eq, %155, %219 : vector<8x1xi32>
    %cst_77 = arith.constant 0.000000e+00 : f32
    %221 = vector.broadcast %cst_77 : f32 to vector<8x1xf32>
    %222 = arith.select %220, %167, %221 : vector<8x1xi1>, vector<8x1xf32>
    %223 = arith.mulf %218, %209 : vector<8x128xf32>
    %224 = vector.broadcast %222 : vector<8x1xf32> to vector<8x128xf32>
    %225 = arith.mulf %224, %223 : vector<8x128xf32>
    %c6 = arith.constant 6 : index
    %c0_78 = arith.constant 0 : index
    %226 = vector.load %arg2[%c6, %c0_78] : memref<8x32xf32, #tpu.memory_space<vmem>>, vector<1x32xf32>
    %227 = vector.broadcast %222 : vector<8x1xf32> to vector<8x32xf32>
    %228 = vector.broadcast %226 : vector<1x32xf32> to vector<8x32xf32>
    %229 = arith.mulf %227, %228 : vector<8x32xf32>
    %230 = arith.addf %199, %229 : vector<8x32xf32>
    %231 = tpu.concatenate %194, %225 in 1 : vector<8x128xf32>, vector<8x128xf32> -> vector<8x256xf32>
    %c0_79 = arith.constant 0 : index
    %c0_80 = arith.constant 0 : index
    %232 = vector.load %arg9[%c0_79, %c0_80] : memref<256x32xf32, #tpu.memory_space<vmem>>, vector<256x32xf32>
    %cst_81 = arith.constant dense<0.000000e+00> : vector<8x32xf32>
    %233 = tpu.matmul %231, %232, %cst_81 {dimension_numbers = #tpu.dot_dimension_numbers<[1], [0], [0], [1], [0, 0, 1, 1], [], []>} : vector<8x256xf32>, vector<256x32xf32>, vector<8x32xf32> -> vector<8x32xf32>
    %234 = arith.addf %233, %230 : vector<8x32xf32>
    %235 = arith.addf %120, %234 : vector<8x32xf32>
    %c0_82 = arith.constant 0 : index
    %c0_83 = arith.constant 0 : index
    %236 = vector.load %arg10[%c0_82, %c0_83] : memref<8x32xf32, #tpu.memory_space<vmem>>, vector<8x32xf32>
    tpu.vector_store %arg10[%c0_82, %c0_83], %235 {strides = array<i32>} : memref<8x32xf32, #tpu.memory_space<vmem>>, vector<8x32xf32>,
    return
  }
  func.func @transform_0(%arg0: i32) -> (i32, i32) {
    %c0_i32 = arith.constant 0 : i32
    %c0_i32_0 = arith.constant 0 : i32
    return %arg0, %c0_i32 : i32, i32
  }
  func.func @transform_1(%arg0: i32) -> (i32, i32) {
    %c0_i32 = arith.constant 0 : i32
    %c0_i32_0 = arith.constant 0 : i32
    %c0_i32_1 = arith.constant 0 : i32
    return %c0_i32, %c0_i32_0 : i32, i32
  }
  func.func @transform_2(%arg0: i32) -> (i32, i32) {
    %c0_i32 = arith.constant 0 : i32
    %c0_i32_0 = arith.constant 0 : i32
    %c0_i32_1 = arith.constant 0 : i32
    return %c0_i32, %c0_i32_0 : i32, i32
  }
  func.func @transform_3(%arg0: i32) -> (i32, i32) {
    %c0_i32 = arith.constant 0 : i32
    %c0_i32_0 = arith.constant 0 : i32
    %c0_i32_1 = arith.constant 0 : i32
    return %c0_i32, %c0_i32_0 : i32, i32
  }
  func.func @transform_4(%arg0: i32) -> (i32, i32) {
    %c0_i32 = arith.constant 0 : i32
    %c0_i32_0 = arith.constant 0 : i32
    %c0_i32_1 = arith.constant 0 : i32
    return %c0_i32, %c0_i32_0 : i32, i32
  }
  func.func @transform_5(%arg0: i32) -> (i32, i32) {
    %c0_i32 = arith.constant 0 : i32
    %c0_i32_0 = arith.constant 0 : i32
    %c0_i32_1 = arith.constant 0 : i32
    return %c0_i32, %c0_i32_0 : i32, i32
  }
  func.func @transform_6(%arg0: i32) -> (i32, i32, i32) {
    %c0_i32 = arith.constant 0 : i32
    %c0_i32_0 = arith.constant 0 : i32
    %c0_i32_1 = arith.constant 0 : i32
    %c0_i32_2 = arith.constant 0 : i32
    return %c0_i32, %c0_i32_0, %c0_i32_1 : i32, i32, i32
  }
  func.func @transform_7(%arg0: i32) -> (i32, i32, i32) {
    %c0_i32 = arith.constant 0 : i32
    %c0_i32_0 = arith.constant 0 : i32
    %c0_i32_1 = arith.constant 0 : i32
    %c0_i32_2 = arith.constant 0 : i32
    return %c0_i32, %c0_i32_0, %c0_i32_1 : i32, i32, i32
  }
  func.func @transform_8(%arg0: i32) -> (i32, i32) {
    %c0_i32 = arith.constant 0 : i32
    %c0_i32_0 = arith.constant 0 : i32
    %c0_i32_1 = arith.constant 0 : i32
    return %c0_i32, %c0_i32_0 : i32, i32
  }
  func.func @transform_9(%arg0: i32) -> (i32, i32) {
    %c0_i32 = arith.constant 0 : i32
    %c0_i32_0 = arith.constant 0 : i32
    return %arg0, %c0_i32 : i32, i32
  }
}

</mosaic_0001>

<llo_original>
// kernel: tpu_custom_call.1
$region0: #{tpu_custom_call.1}
  #allocation0 [shape = 'u32[]', space=smem, size = 0x4, offset = 0x4, fixed_abs, tag = 'smem constant byte address 0x4 - core index']
  #allocation1 [shape = 'u32[144,128]{1,0:T(1,128)}', space=vmem, size = 0x12000, scoped, tag = 'internal scratch']
  %s0 = inlined_call_operand.vmem [shape: f32[16,32], index: 0, kind: input, shape index: {}]
  %s1 = inlined_call_operand.vmem [shape: f32[8,32], index: 1, kind: input, shape index: {}]
  %s2 = inlined_call_operand.vmem [shape: f32[32,96], index: 2, kind: input, shape index: {}]
  %s3 = inlined_call_operand.vmem [shape: f32[32,32], index: 3, kind: input, shape index: {}]
  %s4 = inlined_call_operand.vmem [shape: f32[32,384], index: 4, kind: input, shape index: {}]
  %s5 = inlined_call_operand.vmem [shape: f32[1,384], index: 5, kind: input, shape index: {}]
  %s6 = inlined_call_operand.hbm [shape: f32[2,128,256], index: 6, kind: input, shape index: {}]
  %s7 = inlined_call_operand.vmem [shape: f32[2,1,256], index: 7, kind: input, shape index: {}]
  %s8 = inlined_call_operand.vmem [shape: f32[256,32], index: 8, kind: input, shape index: {}]
  %s9 = inlined_call_operand.hbm [shape: f32[16,32], index: 9, kind: output, shape index: {}]
  %s10 = sld [smem:[#allocation0]]
  $region73: #{tpu_custom_call.1} parent=0
    _
  %s12 = ssub.s32 1, %s10
  %s13 = scalar_select 0, %s12, %s10
  $region1: #{tpu_custom_call.1} parent=0
    #allocation2 [shape = 'u8[262144]{0}', space=vmem, size = 0x40000, scoped, tag = 'input window, operand 6, single buffered']
    #allocation3 [shape = 's32[2]{0}', space=sflag, size = 0x8, scoped, tag = 'scoped memory for tpu_custom_call.1']
    #allocation4 [shape = 's32[2]{0}', space=sflag, size = 0x8, scoped, tag = 'scoped memory for tpu_custom_call.1']
    #allocation5 [shape = 'u8[8192]{0}', space=vmem, size = 0x2000, scoped, tag = 'output window, operand 0']
    %14 = vsyncpa [#allocation3], 0
    %15 = vsyncpa [#allocation4], 0
    %s16 = scalar_lea.sflag [#allocation4], 1
    %17 = vsyncpa %s16, 0
    loop: start=0, step=1, limit=4
    $region2: #{tpu_custom_call.1} parent=1 // loop_pre_header
      _
    $region3: #{tpu_custom_call.1} parent=1 // loop_header
      %s19 = sphi 0, %s23
      %p20 = scmp.ge.s32.totalorder %s19, 4
      %s29 = sphi 0, %s31
      %s32 = sphi 0, %s29
      %s33 = sphi 0, %s32
      %s49 = sphi 0, %s33
      %s53 = sphi 0, %s53
      %s55 = sphi 0, %s53
      %s56 = sphi 0, %s55
      %s70 = sphi 0, %s56
      %s74 = sphi 0, %s74
      %s76 = sphi 0, %s74
      %s77 = sphi 0, %s76
      %s91 = sphi 0, %s77
      %s95 = sphi 0, %s95
      %s97 = sphi 0, %s95
      %s98 = sphi 0, %s97
      %s112 = sphi 0, %s98
      %s116 = sphi 0, %s116
      %s118 = sphi 0, %s116
      %s119 = sphi 0, %s118
      %s133 = sphi 0, %s119
      %s137 = sphi 0, %s137
      %s139 = sphi 0, %s137
      %s140 = sphi 0, %s139
      %s154 = sphi 0, %s140
      %s158 = sphi 0, %s158
      %s160 = sphi 0, %s158
      %s161 = sphi 0, %s160
      %s175 = sphi 0, %s161
      %s179 = sphi 0, %s179
      %s181 = sphi 0, %s179
      %s182 = sphi 0, %s181
      %s196 = sphi 0, %s182
      %s200 = sphi 0, %s200
      %s202 = sphi 0, %s200
      %s203 = sphi 0, %s202
      %s217 = sphi 0, %s203
      %s223 = sphi 0, %s225
      %s226 = sphi 0, %s223
      %s227 = sphi 0, %s226
      %s243 = sphi 0, %s227
    $region4: #{tpu_custom_call.1} parent=1 // loop_header_branch
      %22 = sbr.rel (%p20) target = $region8
    $region5: #{tpu_custom_call.1} parent=1 // loop_body
      %s24 = ssub.s32 %s19, 1
      %s25 = ssub.s32 %s19, 2
      %s26 = sadd.s32 %s19, 1
      %s27 = ssub.s32 %s19, %s26
      %p28 = scmp.eq.s32.totalorder %s27, 0
      %s30 = sadd.s32 %s29, 1
      %s31 = scalar_select %p28, %s29, %s30
      %p34 = pneg %p28
      %p35 = scmp.eq.s32.totalorder %s19, 1
      %p36 = por %p34, %p35
      %p37 = scmp.ne.s32.totalorder %s29, %s32
      %p38 = scmp.eq.s32.totalorder %s19, 0
      %p39 = por %p37, %p38
      %p40 = scmp.ne.s32.totalorder %s29, %s32
      %p41 = scmp.eq.s32.totalorder %s24, 1
      %p42 = por %p40, %p41
      %p43 = scmp.ne.s32.totalorder %s32, %s33
      %p44 = scmp.eq.s32.totalorder %s24, 0
      %p45 = por %p43, %p44
      %p46 = scmp.ne.s32.totalorder %s32, %s33
      %p47 = scmp.eq.s32.totalorder %s25, 1
      %p48 = por %p46, %p47
      %p50 = scmp.ne.s32.totalorder %s33, %s49
      %p51 = scmp.eq.s32.totalorder %s25, 0
      %p52 = por %p50, %p51
      %s54 = sadd.s32 %s53, 1
      %p57 = scmp.eq.s32.totalorder %s19, 1
      %p58 = scmp.ne.s32.totalorder %s53, %s55
      %p59 = scmp.eq.s32.totalorder %s19, 0
      %p60 = por %p58, %p59
      %p61 = scmp.ne.s32.totalorder %s53, %s55
      %p62 = scmp.eq.s32.totalorder %s24, 1
      %p63 = por %p61, %p62
      %p64 = scmp.ne.s32.totalorder %s55, %s56
      %p65 = scmp.eq.s32.totalorder %s24, 0
      %p66 = por %p64, %p65
      %p67 = scmp.ne.s32.totalorder %s55, %s56
      %p68 = scmp.eq.s32.totalorder %s25, 1
      %p69 = por %p67, %p68
      %p71 = scmp.ne.s32.totalorder %s56, %s70
      %p72 = scmp.eq.s32.totalorder %s25, 0
      %p73 = por %p71, %p72
      %s75 = sadd.s32 %s74, 1
      %p78 = scmp.eq.s32.totalorder %s19, 1
      %p79 = scmp.ne.s32.totalorder %s74, %s76
      %p80 = scmp.eq.s32.totalorder %s19, 0
      %p81 = por %p79, %p80
      %p82 = scmp.ne.s32.totalorder %s74, %s76
      %p83 = scmp.eq.s32.totalorder %s24, 1
      %p84 = por %p82, %p83
      %p85 = scmp.ne.s32.totalorder %s76, %s77
      %p86 = scmp.eq.s32.totalorder %s24, 0
      %p87 = por %p85, %p86
      %p88 = scmp.ne.s32.totalorder %s76, %s77
      %p89 = scmp.eq.s32.totalorder %s25, 1
      %p90 = por %p88, %p89
      %p92 = scmp.ne.s32.totalorder %s77, %s91
      %p93 = scmp.eq.s32.totalorder %s25, 0
      %p94 = por %p92, %p93
      %s96 = sadd.s32 %s95, 1
      %p99 = scmp.eq.s32.totalorder %s19, 1
      %p100 = scmp.ne.s32.totalorder %s95, %s97
      %p101 = scmp.eq.s32.totalorder %s19, 0
      %p102 = por %p100, %p101
      %p103 = scmp.ne.s32.totalorder %s95, %s97
      %p104 = scmp.eq.s32.totalorder %s24, 1
      %p105 = por %p103, %p104
      %p106 = scmp.ne.s32.totalorder %s97, %s98
      %p107 = scmp.eq.s32.totalorder %s24, 0
      %p108 = por %p106, %p107
      %p109 = scmp.ne.s32.totalorder %s97, %s98
      %p110 = scmp.eq.s32.totalorder %s25, 1
      %p111 = por %p109, %p110
      %p113 = scmp.ne.s32.totalorder %s98, %s112
      %p114 = scmp.eq.s32.totalorder %s25, 0
      %p115 = por %p113, %p114
      %s117 = sadd.s32 %s116, 1
      %p120 = scmp.eq.s32.totalorder %s19, 1
      %p121 = scmp.ne.s32.totalorder %s116, %s118
      %p122 = scmp.eq.s32.totalorder %s19, 0
      %p123 = por %p121, %p122
      %p124 = scmp.ne.s32.totalorder %s116, %s118
      %p125 = scmp.eq.s32.totalorder %s24, 1
      %p126 = por %p124, %p125
      %p127 = scmp.ne.s32.totalorder %s118, %s119
      %p128 = scmp.eq.s32.totalorder %s24, 0
      %p129 = por %p127, %p128
      %p130 = scmp.ne.s32.totalorder %s118, %s119
      %p131 = scmp.eq.s32.totalorder %s25, 1
      %p132 = por %p130, %p131
      %p134 = scmp.ne.s32.totalorder %s119, %s133
      %p135 = scmp.eq.s32.totalorder %s25, 0
      %p136 = por %p134, %p135
      %s138 = sadd.s32 %s137, 1
      %p141 = scmp.eq.s32.totalorder %s19, 1
      %p142 = scmp.ne.s32.totalorder %s137, %s139
      %p143 = scmp.eq.s32.totalorder %s19, 0
      %p144 = por %p142, %p143
      %p145 = scmp.ne.s32.totalorder %s137, %s139
      %p146 = scmp.eq.s32.totalorder %s24, 1
      %p147 = por %p145, %p146
      %p148 = scmp.ne.s32.totalorder %s139, %s140
      %p149 = scmp.eq.s32.totalorder %s24, 0
      %p150 = por %p148, %p149
      %p151 = scmp.ne.s32.totalorder %s139, %s140
      %p152 = scmp.eq.s32.totalorder %s25, 1
      %p153 = por %p151, %p152
      %p155 = scmp.ne.s32.totalorder %s140, %s154
      %p156 = scmp.eq.s32.totalorder %s25, 0
      %p157 = por %p155, %p156
      %s159 = sadd.s32 %s158, 1
      %p162 = scmp.eq.s32.totalorder %s19, 1
      %p163 = scmp.ne.s32.totalorder %s158, %s160
      %p164 = scmp.eq.s32.totalorder %s19, 0
      %p165 = por %p163, %p164
      %p166 = scmp.ne.s32.totalorder %s158, %s160
      %p167 = scmp.eq.s32.totalorder %s24, 1
      %p168 = por %p166, %p167
      %p169 = scmp.ne.s32.totalorder %s160, %s161
      %p170 = scmp.eq.s32.totalorder %s24, 0
      %p171 = por %p169, %p170
      %p172 = scmp.ne.s32.totalorder %s160, %s161
      %p173 = scmp.eq.s32.totalorder %s25, 1
      %p174 = por %p172, %p173
      %p176 = scmp.ne.s32.totalorder %s161, %s175
      %p177 = scmp.eq.s32.totalorder %s25, 0
      %p178 = por %p176, %p177
      %s180 = sadd.s32 %s179, 1
      %p183 = scmp.eq.s32.totalorder %s19, 1
      %p184 = scmp.ne.s32.totalorder %s179, %s181
      %p185 = scmp.eq.s32.totalorder %s19, 0
      %p186 = por %p184, %p185
      %p187 = scmp.ne.s32.totalorder %s179, %s181
      %p188 = scmp.eq.s32.totalorder %s24, 1
      %p189 = por %p187, %p188
      %p190 = scmp.ne.s32.totalorder %s181, %s182
      %p191 = scmp.eq.s32.totalorder %s24, 0
      %p192 = por %p190, %p191
      %p193 = scmp.ne.s32.totalorder %s181, %s182
      %p194 = scmp.eq.s32.totalorder %s25, 1
      %p195 = por %p193, %p194
      %p197 = scmp.ne.s32.totalorder %s182, %s196
      %p198 = scmp.eq.s32.totalorder %s25, 0
      %p199 = por %p197, %p198
      %s201 = sadd.s32 %s200, 1
      %p204 = scmp.eq.s32.totalorder %s19, 1
      %p205 = scmp.ne.s32.totalorder %s200, %s202
      %p206 = scmp.eq.s32.totalorder %s19, 0
      %p207 = por %p205, %p206
      %p208 = scmp.ne.s32.totalorder %s200, %s202
      %p209 = scmp.eq.s32.totalorder %s24, 1
      %p210 = por %p208, %p209
      %p211 = scmp.ne.s32.totalorder %s202, %s203
      %p212 = scmp.eq.s32.totalorder %s24, 0
      %p213 = por %p211, %p212
      %p214 = scmp.ne.s32.totalorder %s202, %s203
      %p215 = scmp.eq.s32.totalorder %s25, 1
      %p216 = por %p214, %p215
      %p218 = scmp.ne.s32.totalorder %s203, %s217
      %p219 = scmp.eq.s32.totalorder %s25, 0
      %p220 = por %p218, %p219
      %s221 = ssub.s32 %s19, %s26
      %p222 = scmp.eq.s32.totalorder %s221, 0
      %s224 = sadd.s32 %s223, 1
      %s225 = scalar_select %p222, %s223, %s224
      %p228 = pneg %p222
      %p229 = scmp.eq.s32.totalorder %s19, 1
      %p230 = por %p228, %p229
      %p231 = scmp.ne.s32.totalorder %s223, %s226
      %p232 = scmp.eq.s32.totalorder %s19, 0
      %p233 = por %p231, %p232
      %p234 = scmp.ne.s32.totalorder %s223, %s226
      %p235 = scmp.eq.s32.totalorder %s24, 1
      %p236 = por %p234, %p235
      %p237 = scmp.ne.s32.totalorder %s226, %s227
      %p238 = scmp.eq.s32.totalorder %s24, 0
      %p239 = por %p237, %p238
      %p240 = scmp.ne.s32.totalorder %s226, %s227
      %p241 = scmp.eq.s32.totalorder %s25, 1
      %p242 = por %p240, %p241
      %p244 = scmp.ne.s32.totalorder %s227, %s243
      %p245 = scmp.eq.s32.totalorder %s25, 0
      %p246 = por %p244, %p245
      %p247 = scmp.le.s32.totalorder 1, %s19
      %p248 = scmp.lt.s32.totalorder %s19, 3
      %p249 = pnand %p247, %p248
      %p250 = pneg %p249
      // Predicated region
      $region9: #{tpu_custom_call.1} parent=5 // pred_check
        _
      $region10: #{tpu_custom_call.1} parent=5 // pred_check_branch
        %252 = sbr.rel (%p249) target = $region12
      $region11: #{tpu_custom_call.1} parent=5 // pred_region
        %s253 = ssub.s32 %s19, 1
        // Predicated region
        $region13: #{tpu_custom_call.1} parent=11 // pred_check
          %p254 = pneg %p66
        $region14: #{tpu_custom_call.1} parent=11 // pred_check_branch
          %256 = sbr.rel (%p254) target = $region16
        $region15: #{tpu_custom_call.1} parent=11 // pred_region
          _
        $region16: #{tpu_custom_call.1} parent=11 // pred_fallthru
          _
        // Predicated region
        $region17: #{tpu_custom_call.1} parent=11 // pred_check
          %p257 = pneg %p87
        $region18: #{tpu_custom_call.1} parent=11 // pred_check_branch
          %259 = sbr.rel (%p257) target = $region20
        $region19: #{tpu_custom_call.1} parent=11 // pred_region
          _
        $region20: #{tpu_custom_call.1} parent=11 // pred_fallthru
          _
        // Predicated region
        $region21: #{tpu_custom_call.1} parent=11 // pred_check
          %p260 = pneg %p108
        $region22: #{tpu_custom_call.1} parent=11 // pred_check_branch
          %262 = sbr.rel (%p260) target = $region24
        $region23: #{tpu_custom_call.1} parent=11 // pred_region
          _
        $region24: #{tpu_custom_call.1} parent=11 // pred_fallthru
          _
        // Predicated region
        $region25: #{tpu_custom_call.1} parent=11 // pred_check
          %p263 = pneg %p129
        $region26: #{tpu_custom_call.1} parent=11 // pred_check_branch
          %265 = sbr.rel (%p263) target = $region28
        $region27: #{tpu_custom_call.1} parent=11 // pred_region
          _
        $region28: #{tpu_custom_call.1} parent=11 // pred_fallthru
          _
        // Predicated region
        $region29: #{tpu_custom_call.1} parent=11 // pred_check
          %p266 = pneg %p150
        $region30: #{tpu_custom_call.1} parent=11 // pred_check_branch
          %268 = sbr.rel (%p266) target = $region32
        $region31: #{tpu_custom_call.1} parent=11 // pred_region
          _
        $region32: #{tpu_custom_call.1} parent=11 // pred_fallthru
          _
        // Predicated region
        $region33: #{tpu_custom_call.1} parent=11 // pred_check
          %p269 = pneg %p171
        $region34: #{tpu_custom_call.1} parent=11 // pred_check_branch
          %271 = sbr.rel (%p269) target = $region36
        $region35: #{tpu_custom_call.1} parent=11 // pred_region
          %s273 = ssub.s32 8192, 8192
          %274 = vsyncadd [#allocation3], %s273
          %s275 = sshll.u32 [#allocation2], 4
          %s276 = int_to_ptr.vmem [resolvable:$true] %s275
          %281 = dma.hbm_to_vmem [thread:$0]  %s6, 8192, %s276, [#allocation3], 256, 256, 16
        $region36: #{tpu_custom_call.1} parent=11 // pred_fallthru
          _
        // Predicated region
        $region37: #{tpu_custom_call.1} parent=11 // pred_check
          %p282 = pneg %p192
        $region38: #{tpu_custom_call.1} parent=11 // pred_check_branch
          %284 = sbr.rel (%p282) target = $region40
        $region39: #{tpu_custom_call.1} parent=11 // pred_region
          _
        $region40: #{tpu_custom_call.1} parent=11 // pred_fallthru
          _
        // Predicated region
        $region41: #{tpu_custom_call.1} parent=11 // pred_check
          %p285 = pneg %p213
        $region42: #{tpu_custom_call.1} parent=11 // pred_check_branch
          %287 = sbr.rel (%p285) target = $region44
        $region43: #{tpu_custom_call.1} parent=11 // pred_region
          _
        $region44: #{tpu_custom_call.1} parent=11 // pred_fallthru
          _
      $region12: #{tpu_custom_call.1} parent=5 // pred_fallthru
        _
      %p288 = scmp.lt.s32.totalorder %s19, 2
      // Predicated region
      $region45: #{tpu_custom_call.1} parent=5 // pred_check
        %p289 = pneg %p288
      $region46: #{tpu_custom_call.1} parent=5 // pred_check_branch
        %291 = sbr.rel (%p289) target = $region48
      $region47: #{tpu_custom_call.1} parent=5 // pred_region
        // Predicated region
        $region49: #{tpu_custom_call.1} parent=47 // pred_check
          %p292 = pneg %p39
        $region50: #{tpu_custom_call.1} parent=47 // pred_check_branch
          %294 = sbr.rel (%p292) target = $region52
        $region51: #{tpu_custom_call.1} parent=47 // pred_region
          %p295 = scmp.lt.s32.totalorder %s19, 1
          %s296 = scalar_select %p295, %s19, 1
          %s297 = smul.addr %s296, 8
          %s298 = scalar_lea.vmem %s0, %s297
        $region52: #{tpu_custom_call.1} parent=47 // pred_fallthru
          _
      $region48: #{tpu_custom_call.1} parent=5 // pred_fallthru
        _
      %p299 = scmp.le.s32.totalorder 1, %s19
      %p300 = scmp.lt.s32.totalorder %s19, 3
      %p301 = pnand %p299, %p300
      %p302 = pneg %p301
      // Predicated region
      $region53: #{tpu_custom_call.1} parent=5 // pred_check
        _
      $region54: #{tpu_custom_call.1} parent=5 // pred_check_branch
        %304 = sbr.rel (%p301) target = $region56
      $region55: #{tpu_custom_call.1} parent=5 // pred_region
        %s305 = ssub.s32 %s19, 1
        // Predicated region
        $region57: #{tpu_custom_call.1} parent=55 // pred_check
          %p306 = pneg %p171
        $region58: #{tpu_custom_call.1} parent=55 // pred_check_branch
          %308 = sbr.rel (%p306) target = $region60
        $region59: #{tpu_custom_call.1} parent=55 // pred_region
          %309 = dma.done [#allocation3], 8192
        $region60: #{tpu_custom_call.1} parent=55 // pred_fallthru
          _
        %p310 = scmp.lt.s32.totalorder %s24, 1
        %s311 = scalar_select %p310, %s24, 1
        %s312 = smul.addr %s311, 8
        %s313 = scalar_lea.vmem %s0, %s312
        %p314 = pneg %p45
        %p315 = pneg %p42
        %p316 = pneg %p66
        %p317 = pneg %p63
        %p318 = pneg %p87
        %p319 = pneg %p84
        %p320 = pneg %p108
        %p321 = pneg %p105
        %p322 = pneg %p129
        %p323 = pneg %p126
        %p324 = pneg %p150
        %p325 = pneg %p147
        %p326 = pneg %p171
        %p327 = pneg %p168
        %p328 = pneg %p192
        %p329 = pneg %p189
        %p330 = pneg %p213
        %p331 = pneg %p210
        %p332 = pneg %p239
        %p333 = pneg %p236
        %s334 = sand.u32 %s226, 1
        %s335 = scalar_lea.sflag [#allocation4], %s334
        %s336 = sand.u32 %s226, 1
        %s337 = smul.addr %s336, 8
        %s338 = scalar_lea.vmem [#allocation5], %s337
        %p339 = scmp.lt.s32.totalorder %s24, 1
        %s340 = scalar_select %p339, %s24, 1
        %s341 = smul.addr %s340, 8
        %s342 = scalar_lea.vmem %s0, %s341
        %v343 = vld [vmem:[%s342] sm:$0xff]
        %v344 = vld [vmem:[%s1] sm:$0x1]
        %v345 = vld [vmem:[%s1 + $0x1] sm:$0x1]
        %v346 = vld [vmem:[%s1 + $0x2] sm:$0x1]
        %v347 = vld [vmem:[%s1 + $0x3] sm:$0x1]
        %v348 = vld [vmem:[%s1 + $0x4] sm:$0x1]
        %vm349 = vcmask 261120
        %v350 = vsel %vm349, %v343, 0.0
        %351 = vadd.xlane.f32.xlu0 %v350
        %v352 = vpop.xlane.xlu0 %351
        %v353 = vmul.f32 %v352, 0.03125
        %v354 = vsub.f32 %v343, %v353
        %v355 = vmul.f32 %v354, %v354
        %v356 = vsel %vm349, %v355, 0.0
        %357 = vadd.xlane.f32.xlu0 %v356
        %v358 = vpop.xlane.xlu0 %357
        %v359 = vmul.f32 %v358, 0.032258064
        %v360 = vadd.f32 %v359, 1e-05
        %v361 = vrsqrt.pop %v360
        %v362 = vmul.f32 %v354, %v361
        %v363 = vlaneseq
        %v364 = vshrl.u32 %v363, 7
        %v365 = vsub.s32 0, %v364
        %v366 = vrot.slane %v344, %v365
        %v367 = vmul.f32 %v362, %v366
        %v368 = vlaneseq
        %v369 = vshrl.u32 %v368, 7
        %v370 = vsub.s32 0, %v369
        %v371 = vrot.slane %v345, %v370
        %v372 = vadd.f32 %v367, %v371
        %v373 = vld [vmem:[%s2] sm:$0xff]
        %v374 = vld [vmem:[%s2 + $0x8] sm:$0xff]
        %v375 = vld [vmem:[%s2 + $0x10] sm:$0xff]
        %v376 = vld [vmem:[%s2 + $0x18] sm:$0xff]
        %v378 = vsel %vm349, %v372, 0
        %380 = vmatprep.subr.mxu0 0.0
        %381 = vmatpush1.msra.mxu0 %v373
        %382 = vmatprep.subr.mxu0 0.0
        %383 = vmatpush1.msra.mxu0 %v374
        %384 = vmatprep.subr.mxu0 0.0
        %385 = vmatpush1.msra.mxu0 %v375
        %386 = vmatprep.subr.mxu0 0.0
        %387 = vmatpush1.msra.mxu0 %v376
        %388 = vmatprep.subr.mxu0 0.0
        %389 = vmatpush1.msra.mxu0 0.0
        %390 = vmatprep.subr.mxu0 0.0
        %391 = vmatpush1.msra.mxu0 0.0
        %392 = vmatprep.subr.mxu0 0.0
        %393 = vmatpush1.msra.mxu0 0.0
        %394 = vmatprep.subr.mxu0 0.0
        %395 = vmatpush1.msra.mxu0 0.0
        %396 = vmatprep.subr.mxu0 0.0
        %397 = vmatpush1.msra.mxu0 0.0
        %398 = vmatprep.subr.mxu0 0.0
        %399 = vmatpush1.msra.mxu0 0.0
        %400 = vmatprep.subr.mxu0 0.0
        %401 = vmatpush1.msra.mxu0 0.0
        %402 = vmatprep.subr.mxu0 0.0
        %403 = vmatpush1.msra.mxu0 0.0
        %404 = vmatprep.subr.mxu0 0.0
        %405 = vmatpush1.msra.mxu0 0.0
        %406 = vmatprep.subr.mxu0 0.0
        %407 = vmatpush1.msra.mxu0 0.0
        %408 = vmatprep.subr.mxu0 0.0
        %409 = vmatpush1.msra.mxu0 0.0
        %410 = vmatprep.subr.mxu0 0.0
        %411 = vmatpush1.msra.mxu0 0.0
        %412 = vmatprep.subr.mxu0 0.0
        %413 = vmatpush1.msra.mxu0 0.0
        %414 = vmatprep.subr.mxu0 0.0
        %415 = vmatpush1.msra.mxu0 0.0
        %416 = vmatprep.subr.mxu0 0.0
        %417 = vmatpush1.msra.mxu0 0.0
        %418 = vmatprep.subr.mxu0 0.0
        %419 = vmatpush1.msra.mxu0 0.0
        %420 = vmatprep.subr.mxu0 0.0
        %421 = vmatpush1.msra.mxu0 0.0
        %422 = vmatprep.subr.mxu0 0.0
        %423 = vmatpush1.msra.mxu0 0.0
        %424 = vmatprep.subr.mxu0 0.0
        %425 = vmatpush1.msra.mxu0 0.0
        %426 = vmatprep.subr.mxu0 0.0
        %427 = vmatpush1.msra.mxu0 0.0
        %428 = vmatprep.subr.mxu0 0.0
        %429 = vmatpush1.msra.mxu0 0.0
        %430 = vmatprep.subr.mxu0 0.0
        %431 = vmatpush1.msra.mxu0 0.0
        %432 = vmatprep.subr.mxu0 0.0
        %433 = vmatpush1.msra.mxu0 0.0
        %434 = vmatprep.subr.mxu0 0.0
        %435 = vmatpush1.msra.mxu0 0.0
        %436 = vmatprep.subr.mxu0 0.0
        %437 = vmatpush1.msra.mxu0 0.0
        %438 = vmatprep.subr.mxu0 0.0
        %439 = vmatpush1.msra.mxu0 0.0
        %440 = vmatprep.subr.mxu0 0.0
        %441 = vmatpush1.msra.mxu0 0.0
        %442 = vmatprep.subr.mxu0 0.0
        %443 = vmatpush1.msra.mxu0 0.0
        %444 = vmatprep.mubr.f32.mxu0 0.0
        %445 = vmatmul.mubr.f32.gmra.mrb[0].mxu0 %v378
        %v446 = vpop.f32.mrb[0].mxu0
        %v447 = vadd.f32 0.0, %v446
        %v448 = vpop.f32.mrb[0].mxu0
        %449 = vdwg.mxu0
        %v450 = vlaneseq
        %v451 = vshrl.u32 %v450, 7
        %v452 = vlaneseq
        %v453 = vand.u32 %v452, 127
        %v454 = vsub.s32 %v451, %v453
        %vm455 = vcmp.ge.s32.totalorder %v454, 3
        %457 = vrot.lane.b32.xlu0 %v447, 96
        %v458 = vpop.permute.xlu0 %457
        %vm459 = vcmask 64512
        %v460 = vsel %vm459, %v458, 0
        %462 = vmatprep.subr.mxu0 0.0
        %463 = vmatpush1.msra.mxu0 %v447
        %464 = vmatprep.subr.mxu0 0.0
        %465 = vmatpush1.msra.mxu0 0.0
        %466 = vmatprep.subr.mxu0 0.0
        %467 = vmatpush1.msra.mxu0 0.0
        %468 = vmatprep.subr.mxu0 0.0
        %469 = vmatpush1.msra.mxu0 0.0
        %470 = vmatprep.subr.mxu0 0.0
        %471 = vmatpush1.msra.mxu0 0.0
        %472 = vmatprep.subr.mxu0 0.0
        %473 = vmatpush1.msra.mxu0 0.0
        %474 = vmatprep.subr.mxu0 0.0
        %475 = vmatpush1.msra.mxu0 0.0
        %476 = vmatprep.subr.mxu0 0.0
        %477 = vmatpush1.msra.mxu0 0.0
        %478 = vmatprep.subr.mxu0 0.0
        %479 = vmatpush1.msra.mxu0 0.0
        %480 = vmatprep.subr.mxu0 0.0
        %481 = vmatpush1.msra.mxu0 0.0
        %482 = vmatprep.subr.mxu0 0.0
        %483 = vmatpush1.msra.mxu0 0.0
        %484 = vmatprep.subr.mxu0 0.0
        %485 = vmatpush1.msra.mxu0 0.0
        %486 = vmatprep.subr.mxu0 0.0
        %487 = vmatpush1.msra.mxu0 0.0
        %488 = vmatprep.subr.mxu0 0.0
        %489 = vmatpush1.msra.mxu0 0.0
        %490 = vmatprep.subr.mxu0 0.0
        %491 = vmatpush1.msra.mxu0 0.0
        %492 = vmatprep.subr.mxu0 0.0
        %493 = vmatpush1.msra.mxu0 0.0
        %494 = vmatprep.subr.mxu0 0.0
        %495 = vmatpush1.msra.mxu0 0.0
        %496 = vmatprep.subr.mxu0 0.0
        %497 = vmatpush1.msra.mxu0 0.0
        %498 = vmatprep.subr.mxu0 0.0
        %499 = vmatpush1.msra.mxu0 0.0
        %500 = vmatprep.subr.mxu0 0.0
        %501 = vmatpush1.msra.mxu0 0.0
        %502 = vmatprep.subr.mxu0 0.0
        %503 = vmatpush1.msra.mxu0 0.0
        %504 = vmatprep.subr.mxu0 0.0
        %505 = vmatpush1.msra.mxu0 0.0
        %506 = vmatprep.subr.mxu0 0.0
        %507 = vmatpush1.msra.mxu0 0.0
        %508 = vmatprep.subr.mxu0 0.0
        %509 = vmatpush1.msra.mxu0 0.0
        %510 = vmatprep.subr.mxu0 0.0
        %511 = vmatpush1.msra.mxu0 0.0
        %512 = vmatprep.subr.mxu0 0.0
        %513 = vmatpush1.msra.mxu0 0.0
        %514 = vmatprep.subr.mxu0 0.0
        %515 = vmatpush1.msra.mxu0 0.0
        %516 = vmatprep.subr.mxu0 0.0
        %517 = vmatpush1.msra.mxu0 0.0
        %518 = vmatprep.subr.mxu0 0.0
        %519 = vmatpush1.msra.mxu0 0.0
        %520 = vmatprep.subr.mxu0 0.0
        %521 = vmatpush1.msra.mxu0 0.0
        %522 = vmatprep.subr.mxu0 0.0
        %523 = vmatpush1.msra.mxu0 0.0
        %524 = vmatprep.subr.mxu0 0.0
        %525 = vmatpush1.msra.mxu0 0.0
        %526 = vmatprep.mubr.f32.mxu0 0.0
        %527 = vmatmul.mubr.f32.gmra.mrb[0].mxu0 %v460
        %v528 = vpop.f32.mrb[0].mxu0
        %v529 = vadd.f32 0.0, %v528
        %v530 = vpop.f32.mrb[0].mxu0
        %531 = vdwg.mxu0
        %v532 = vmul.f32 %v529, 0.35355338
        %v533 = vsel %vm455, -inf, %v532
        %v534 = vsel %vm459, %v533, -inf
        %535 = vmax.xlane.f32.xlu0 %v534
        %v536 = vpop.xlane.xlu0 %535
        %v537 = vsub.f32 %v533, %v536
        %v538 = vmul.f32 %v537, 1.442695
        %v539 = vpow.pop %v538
        %v540 = vsel %vm459, %v539, 0.0
        %541 = vadd.xlane.f32.xlu0 %v540
        %v542 = vpop.xlane.xlu0 %541
        %v543 = vrcp.pop %v542
        %v544 = vmul.f32 %v539, %v543
        %545 = vrot.lane.b32.xlu0 %v447, 64
        %v546 = vpop.permute.xlu0 %545
        %v549 = vsel %vm459, %v544, 0
        %551 = vmatprep.subr.mxu0 0.0
        %552 = vmatpush1.msra.mxu0 %v546
        %553 = vmatprep.subr.mxu0 0.0
        %554 = vmatpush1.msra.mxu0 0.0
        %555 = vmatprep.subr.mxu0 0.0
        %556 = vmatpush1.msra.mxu0 0.0
        %557 = vmatprep.subr.mxu0 0.0
        %558 = vmatpush1.msra.mxu0 0.0
        %559 = vmatprep.subr.mxu0 0.0
        %560 = vmatpush1.msra.mxu0 0.0
        %561 = vmatprep.subr.mxu0 0.0
        %562 = vmatpush1.msra.mxu0 0.0
        %563 = vmatprep.subr.mxu0 0.0
        %564 = vmatpush1.msra.mxu0 0.0
        %565 = vmatprep.subr.mxu0 0.0
        %566 = vmatpush1.msra.mxu0 0.0
        %567 = vmatprep.subr.mxu0 0.0
        %568 = vmatpush1.msra.mxu0 0.0
        %569 = vmatprep.subr.mxu0 0.0
        %570 = vmatpush1.msra.mxu0 0.0
        %571 = vmatprep.subr.mxu0 0.0
        %572 = vmatpush1.msra.mxu0 0.0
        %573 = vmatprep.subr.mxu0 0.0
        %574 = vmatpush1.msra.mxu0 0.0
        %575 = vmatprep.subr.mxu0 0.0
        %576 = vmatpush1.msra.mxu0 0.0
        %577 = vmatprep.subr.mxu0 0.0
        %578 = vmatpush1.msra.mxu0 0.0
        %579 = vmatprep.subr.mxu0 0.0
        %580 = vmatpush1.msra.mxu0 0.0
        %581 = vmatprep.subr.mxu0 0.0
        %582 = vmatpush1.msra.mxu0 0.0
        %583 = vmatprep.subr.mxu0 0.0
        %584 = vmatpush1.msra.mxu0 0.0
        %585 = vmatprep.subr.mxu0 0.0
        %586 = vmatpush1.msra.mxu0 0.0
        %587 = vmatprep.subr.mxu0 0.0
        %588 = vmatpush1.msra.mxu0 0.0
        %589 = vmatprep.subr.mxu0 0.0
        %590 = vmatpush1.msra.mxu0 0.0
        %591 = vmatprep.subr.mxu0 0.0
        %592 = vmatpush1.msra.mxu0 0.0
        %593 = vmatprep.subr.mxu0 0.0
        %594 = vmatpush1.msra.mxu0 0.0
        %595 = vmatprep.subr.mxu0 0.0
        %596 = vmatpush1.msra.mxu0 0.0
        %597 = vmatprep.subr.mxu0 0.0
        %598 = vmatpush1.msra.mxu0 0.0
        %599 = vmatprep.subr.mxu0 0.0
        %600 = vmatpush1.msra.mxu0 0.0
        %601 = vmatprep.subr.mxu0 0.0
        %602 = vmatpush1.msra.mxu0 0.0
        %603 = vmatprep.subr.mxu0 0.0
        %604 = vmatpush1.msra.mxu0 0.0
        %605 = vmatprep.subr.mxu0 0.0
        %606 = vmatpush1.msra.mxu0 0.0
        %607 = vmatprep.subr.mxu0 0.0
        %608 = vmatpush1.msra.mxu0 0.0
        %609 = vmatprep.subr.mxu0 0.0
        %610 = vmatpush1.msra.mxu0 0.0
        %611 = vmatprep.subr.mxu0 0.0
        %612 = vmatpush1.msra.mxu0 0.0
        %613 = vmatprep.subr.mxu0 0.0
        %614 = vmatpush1.msra.mxu0 0.0
        %615 = vmatprep.mubr.f32.mxu0 0.0
        %616 = vmatmul.mubr.f32.gmra.mrb[0].mxu0 %v549
        %v617 = vpop.f32.mrb[0].mxu0
        %v618 = vadd.f32 0.0, %v617
        %v619 = vpop.f32.mrb[0].mxu0
        %620 = vdwg.mxu0
        %621 = vrot.lane.b32.xlu0 %v447, 88
        %v622 = vpop.permute.xlu0 %621
        %623 = vrot.lane.b32.xlu0 %v447, 120
        %v624 = vpop.permute.xlu0 %623
        %v626 = vsel %vm459, %v622, 0
        %628 = vmatprep.subr.mxu0 0.0
        %629 = vmatpush1.msra.mxu0 %v624
        %630 = vmatprep.subr.mxu0 0.0
        %631 = vmatpush1.msra.mxu0 0.0
        %632 = vmatprep.subr.mxu0 0.0
        %633 = vmatpush1.msra.mxu0 0.0
        %634 = vmatprep.subr.mxu0 0.0
        %635 = vmatpush1.msra.mxu0 0.0
        %636 = vmatprep.subr.mxu0 0.0
        %637 = vmatpush1.msra.mxu0 0.0
        %638 = vmatprep.subr.mxu0 0.0
        %639 = vmatpush1.msra.mxu0 0.0
        %640 = vmatprep.subr.mxu0 0.0
        %641 = vmatpush1.msra.mxu0 0.0
        %642 = vmatprep.subr.mxu0 0.0
        %643 = vmatpush1.msra.mxu0 0.0
        %644 = vmatprep.subr.mxu0 0.0
        %645 = vmatpush1.msra.mxu0 0.0
        %646 = vmatprep.subr.mxu0 0.0
        %647 = vmatpush1.msra.mxu0 0.0
        %648 = vmatprep.subr.mxu0 0.0
        %649 = vmatpush1.msra.mxu0 0.0
        %650 = vmatprep.subr.mxu0 0.0
        %651 = vmatpush1.msra.mxu0 0.0
        %652 = vmatprep.subr.mxu0 0.0
        %653 = vmatpush1.msra.mxu0 0.0
        %654 = vmatprep.subr.mxu0 0.0
        %655 = vmatpush1.msra.mxu0 0.0
        %656 = vmatprep.subr.mxu0 0.0
        %657 = vmatpush1.msra.mxu0 0.0
        %658 = vmatprep.subr.mxu0 0.0
        %659 = vmatpush1.msra.mxu0 0.0
        %660 = vmatprep.subr.mxu0 0.0
        %661 = vmatpush1.msra.mxu0 0.0
        %662 = vmatprep.subr.mxu0 0.0
        %663 = vmatpush1.msra.mxu0 0.0
        %664 = vmatprep.subr.mxu0 0.0
        %665 = vmatpush1.msra.mxu0 0.0
        %666 = vmatprep.subr.mxu0 0.0
        %667 = vmatpush1.msra.mxu0 0.0
        %668 = vmatprep.subr.mxu0 0.0
        %669 = vmatpush1.msra.mxu0 0.0
        %670 = vmatprep.subr.mxu0 0.0
        %671 = vmatpush1.msra.mxu0 0.0
        %672 = vmatprep.subr.mxu0 0.0
        %673 = vmatpush1.msra.mxu0 0.0
        %674 = vmatprep.subr.mxu0 0.0
        %675 = vmatpush1.msra.mxu0 0.0
        %676 = vmatprep.subr.mxu0 0.0
        %677 = vmatpush1.msra.mxu0 0.0
        %678 = vmatprep.subr.mxu0 0.0
        %679 = vmatpush1.msra.mxu0 0.0
        %680 = vmatprep.subr.mxu0 0.0
        %681 = vmatpush1.msra.mxu0 0.0
        %682 = vmatprep.subr.mxu0 0.0
        %683 = vmatpush1.msra.mxu0 0.0
        %684 = vmatprep.subr.mxu0 0.0
        %685 = vmatpush1.msra.mxu0 0.0
        %686 = vmatprep.subr.mxu0 0.0
        %687 = vmatpush1.msra.mxu0 0.0
        %688 = vmatprep.subr.mxu0 0.0
        %689 = vmatpush1.msra.mxu0 0.0
        %690 = vmatprep.subr.mxu0 0.0
        %691 = vmatpush1.msra.mxu0 0.0
        %692 = vmatprep.mubr.f32.mxu0 0.0
        %693 = vmatmul.mubr.f32.gmra.mrb[0].mxu0 %v626
        %v694 = vpop.f32.mrb[0].mxu0
        %v695 = vadd.f32 0.0, %v694
        %v696 = vpop.f32.mrb[0].mxu0
        %697 = vdwg.mxu0
        %v698 = vmul.f32 %v695, 0.35355338
        %v699 = vsel %vm455, -inf, %v698
        %v700 = vsel %vm459, %v699, -inf
        %701 = vmax.xlane.f32.xlu0 %v700
        %v702 = vpop.xlane.xlu0 %701
        %v703 = vsub.f32 %v699, %v702
        %v704 = vmul.f32 %v703, 1.442695
        %v705 = vpow.pop %v704
        %v706 = vsel %vm459, %v705, 0.0
        %707 = vadd.xlane.f32.xlu0 %v706
        %v708 = vpop.xlane.xlu0 %707
        %v709 = vrcp.pop %v708
        %v710 = vmul.f32 %v705, %v709
        %711 = vrot.lane.b32.xlu0 %v447, 56
        %v712 = vpop.permute.xlu0 %711
        %v715 = vsel %vm459, %v710, 0
        %717 = vmatprep.subr.mxu0 0.0
        %718 = vmatpush1.msra.mxu0 %v712
        %719 = vmatprep.subr.mxu0 0.0
        %720 = vmatpush1.msra.mxu0 0.0
        %721 = vmatprep.subr.mxu0 0.0
        %722 = vmatpush1.msra.mxu0 0.0
        %723 = vmatprep.subr.mxu0 0.0
        %724 = vmatpush1.msra.mxu0 0.0
        %725 = vmatprep.subr.mxu0 0.0
        %726 = vmatpush1.msra.mxu0 0.0
        %727 = vmatprep.subr.mxu0 0.0
        %728 = vmatpush1.msra.mxu0 0.0
        %729 = vmatprep.subr.mxu0 0.0
        %730 = vmatpush1.msra.mxu0 0.0
        %731 = vmatprep.subr.mxu0 0.0
        %732 = vmatpush1.msra.mxu0 0.0
        %733 = vmatprep.subr.mxu0 0.0
        %734 = vmatpush1.msra.mxu0 0.0
        %735 = vmatprep.subr.mxu0 0.0
        %736 = vmatpush1.msra.mxu0 0.0
        %737 = vmatprep.subr.mxu0 0.0
        %738 = vmatpush1.msra.mxu0 0.0
        %739 = vmatprep.subr.mxu0 0.0
        %740 = vmatpush1.msra.mxu0 0.0
        %741 = vmatprep.subr.mxu0 0.0
        %742 = vmatpush1.msra.mxu0 0.0
        %743 = vmatprep.subr.mxu0 0.0
        %744 = vmatpush1.msra.mxu0 0.0
        %745 = vmatprep.subr.mxu0 0.0
        %746 = vmatpush1.msra.mxu0 0.0
        %747 = vmatprep.subr.mxu0 0.0
        %748 = vmatpush1.msra.mxu0 0.0
        %749 = vmatprep.subr.mxu0 0.0
        %750 = vmatpush1.msra.mxu0 0.0
        %751 = vmatprep.subr.mxu0 0.0
        %752 = vmatpush1.msra.mxu0 0.0
        %753 = vmatprep.subr.mxu0 0.0
        %754 = vmatpush1.msra.mxu0 0.0
        %755 = vmatprep.subr.mxu0 0.0
        %756 = vmatpush1.msra.mxu0 0.0
        %757 = vmatprep.subr.mxu0 0.0
        %758 = vmatpush1.msra.mxu0 0.0
        %759 = vmatprep.subr.mxu0 0.0
        %760 = vmatpush1.msra.mxu0 0.0
        %761 = vmatprep.subr.mxu0 0.0
        %762 = vmatpush1.msra.mxu0 0.0
        %763 = vmatprep.subr.mxu0 0.0
        %764 = vmatpush1.msra.mxu0 0.0
        %765 = vmatprep.subr.mxu0 0.0
        %766 = vmatpush1.msra.mxu0 0.0
        %767 = vmatprep.subr.mxu0 0.0
        %768 = vmatpush1.msra.mxu0 0.0
        %769 = vmatprep.subr.mxu0 0.0
        %770 = vmatpush1.msra.mxu0 0.0
        %771 = vmatprep.subr.mxu0 0.0
        %772 = vmatpush1.msra.mxu0 0.0
        %773 = vmatprep.subr.mxu0 0.0
        %774 = vmatpush1.msra.mxu0 0.0
        %775 = vmatprep.subr.mxu0 0.0
        %776 = vmatpush1.msra.mxu0 0.0
        %777 = vmatprep.subr.mxu0 0.0
        %778 = vmatpush1.msra.mxu0 0.0
        %779 = vmatprep.subr.mxu0 0.0
        %780 = vmatpush1.msra.mxu0 0.0
        %781 = vmatprep.mubr.f32.mxu0 0.0
        %782 = vmatmul.mubr.f32.gmra.mrb[0].mxu0 %v715
        %v783 = vpop.f32.mrb[0].mxu0
        %v784 = vadd.f32 0.0, %v783
        %v785 = vpop.f32.mrb[0].mxu0
        %786 = vdwg.mxu0
        %787 = vrot.lane.b32.xlu0 %v447, 80
        %v788 = vpop.permute.xlu0 %787
        %789 = vrot.lane.b32.xlu0 %v447, 112
        %v790 = vpop.permute.xlu0 %789
        %v792 = vsel %vm459, %v788, 0
        %794 = vmatprep.subr.mxu0 0.0
        %795 = vmatpush1.msra.mxu0 %v790
        %796 = vmatprep.subr.mxu0 0.0
        %797 = vmatpush1.msra.mxu0 0.0
        %798 = vmatprep.subr.mxu0 0.0
        %799 = vmatpush1.msra.mxu0 0.0
        %800 = vmatprep.subr.mxu0 0.0
        %801 = vmatpush1.msra.mxu0 0.0
        %802 = vmatprep.subr.mxu0 0.0
        %803 = vmatpush1.msra.mxu0 0.0
        %804 = vmatprep.subr.mxu0 0.0
        %805 = vmatpush1.msra.mxu0 0.0
        %806 = vmatprep.subr.mxu0 0.0
        %807 = vmatpush1.msra.mxu0 0.0
        %808 = vmatprep.subr.mxu0 0.0
        %809 = vmatpush1.msra.mxu0 0.0
        %810 = vmatprep.subr.mxu0 0.0
        %811 = vmatpush1.msra.mxu0 0.0
        %812 = vmatprep.subr.mxu0 0.0
        %813 = vmatpush1.msra.mxu0 0.0
        %814 = vmatprep.subr.mxu0 0.0
        %815 = vmatpush1.msra.mxu0 0.0
        %816 = vmatprep.subr.mxu0 0.0
        %817 = vmatpush1.msra.mxu0 0.0
        %818 = vmatprep.subr.mxu0 0.0
        %819 = vmatpush1.msra.mxu0 0.0
        %820 = vmatprep.subr.mxu0 0.0
        %821 = vmatpush1.msra.mxu0 0.0
        %822 = vmatprep.subr.mxu0 0.0
        %823 = vmatpush1.msra.mxu0 0.0
        %824 = vmatprep.subr.mxu0 0.0
        %825 = vmatpush1.msra.mxu0 0.0
        %826 = vmatprep.subr.mxu0 0.0
        %827 = vmatpush1.msra.mxu0 0.0
        %828 = vmatprep.subr.mxu0 0.0
        %829 = vmatpush1.msra.mxu0 0.0
        %830 = vmatprep.subr.mxu0 0.0
        %831 = vmatpush1.msra.mxu0 0.0
        %832 = vmatprep.subr.mxu0 0.0
        %833 = vmatpush1.msra.mxu0 0.0
        %834 = vmatprep.subr.mxu0 0.0
        %835 = vmatpush1.msra.mxu0 0.0
        %836 = vmatprep.subr.mxu0 0.0
        %837 = vmatpush1.msra.mxu0 0.0
        %838 = vmatprep.subr.mxu0 0.0
        %839 = vmatpush1.msra.mxu0 0.0
        %840 = vmatprep.subr.mxu0 0.0
        %841 = vmatpush1.msra.mxu0 0.0
        %842 = vmatprep.subr.mxu0 0.0
        %843 = vmatpush1.msra.mxu0 0.0
        %844 = vmatprep.subr.mxu0 0.0
        %845 = vmatpush1.msra.mxu0 0.0
        %846 = vmatprep.subr.mxu0 0.0
        %847 = vmatpush1.msra.mxu0 0.0
        %848 = vmatprep.subr.mxu0 0.0
        %849 = vmatpush1.msra.mxu0 0.0
        %850 = vmatprep.subr.mxu0 0.0
        %851 = vmatpush1.msra.mxu0 0.0
        %852 = vmatprep.subr.mxu0 0.0
        %853 = vmatpush1.msra.mxu0 0.0
        %854 = vmatprep.subr.mxu0 0.0
        %855 = vmatpush1.msra.mxu0 0.0
        %856 = vmatprep.subr.mxu0 0.0
        %857 = vmatpush1.msra.mxu0 0.0
        %858 = vmatprep.mubr.f32.mxu0 0.0
        %859 = vmatmul.mubr.f32.gmra.mrb[0].mxu0 %v792
        %v860 = vpop.f32.mrb[0].mxu0
        %v861 = vadd.f32 0.0, %v860
        %v862 = vpop.f32.mrb[0].mxu0
        %863 = vdwg.mxu0
        %v864 = vmul.f32 %v861, 0.35355338
        %v865 = vsel %vm455, -inf, %v864
        %v866 = vsel %vm459, %v865, -inf
        %867 = vmax.xlane.f32.xlu0 %v866
        %v868 = vpop.xlane.xlu0 %867
        %v869 = vsub.f32 %v865, %v868
        %v870 = vmul.f32 %v869, 1.442695
        %v871 = vpow.pop %v870
        %v872 = vsel %vm459, %v871, 0.0
        %873 = vadd.xlane.f32.xlu0 %v872
        %v874 = vpop.xlane.xlu0 %873
        %v875 = vrcp.pop %v874
        %v876 = vmul.f32 %v871, %v875
        %877 = vrot.lane.b32.xlu0 %v447, 48
        %v878 = vpop.permute.xlu0 %877
        %v881 = vsel %vm459, %v876, 0
        %883 = vmatprep.subr.mxu0 0.0
        %884 = vmatpush1.msra.mxu0 %v878
        %885 = vmatprep.subr.mxu0 0.0
        %886 = vmatpush1.msra.mxu0 0.0
        %887 = vmatprep.subr.mxu0 0.0
        %888 = vmatpush1.msra.mxu0 0.0
        %889 = vmatprep.subr.mxu0 0.0
        %890 = vmatpush1.msra.mxu0 0.0
        %891 = vmatprep.subr.mxu0 0.0
        %892 = vmatpush1.msra.mxu0 0.0
        %893 = vmatprep.subr.mxu0 0.0
        %894 = vmatpush1.msra.mxu0 0.0
        %895 = vmatprep.subr.mxu0 0.0
        %896 = vmatpush1.msra.mxu0 0.0
        %897 = vmatprep.subr.mxu0 0.0
        %898 = vmatpush1.msra.mxu0 0.0
        %899 = vmatprep.subr.mxu0 0.0
        %900 = vmatpush1.msra.mxu0 0.0
        %901 = vmatprep.subr.mxu0 0.0
        %902 = vmatpush1.msra.mxu0 0.0
        %903 = vmatprep.subr.mxu0 0.0
        %904 = vmatpush1.msra.mxu0 0.0
        %905 = vmatprep.subr.mxu0 0.0
        %906 = vmatpush1.msra.mxu0 0.0
        %907 = vmatprep.subr.mxu0 0.0
        %908 = vmatpush1.msra.mxu0 0.0
        %909 = vmatprep.subr.mxu0 0.0
        %910 = vmatpush1.msra.mxu0 0.0
        %911 = vmatprep.subr.mxu0 0.0
        %912 = vmatpush1.msra.mxu0 0.0
        %913 = vmatprep.subr.mxu0 0.0
        %914 = vmatpush1.msra.mxu0 0.0
        %915 = vmatprep.subr.mxu0 0.0
        %916 = vmatpush1.msra.mxu0 0.0
        %917 = vmatprep.subr.mxu0 0.0
        %918 = vmatpush1.msra.mxu0 0.0
        %919 = vmatprep.subr.mxu0 0.0
        %920 = vmatpush1.msra.mxu0 0.0
        %921 = vmatprep.subr.mxu0 0.0
        %922 = vmatpush1.msra.mxu0 0.0
        %923 = vmatprep.subr.mxu0 0.0
        %924 = vmatpush1.msra.mxu0 0.0
        %925 = vmatprep.subr.mxu0 0.0
        %926 = vmatpush1.msra.mxu0 0.0
        %927 = vmatprep.subr.mxu0 0.0
        %928 = vmatpush1.msra.mxu0 0.0
        %929 = vmatprep.subr.mxu0 0.0
        %930 = vmatpush1.msra.mxu0 0.0
        %931 = vmatprep.subr.mxu0 0.0
        %932 = vmatpush1.msra.mxu0 0.0
        %933 = vmatprep.subr.mxu0 0.0
        %934 = vmatpush1.msra.mxu0 0.0
        %935 = vmatprep.subr.mxu0 0.0
        %936 = vmatpush1.msra.mxu0 0.0
        %937 = vmatprep.subr.mxu0 0.0
        %938 = vmatpush1.msra.mxu0 0.0
        %939 = vmatprep.subr.mxu0 0.0
        %940 = vmatpush1.msra.mxu0 0.0
        %941 = vmatprep.subr.mxu0 0.0
        %942 = vmatpush1.msra.mxu0 0.0
        %943 = vmatprep.subr.mxu0 0.0
        %944 = vmatpush1.msra.mxu0 0.0
        %945 = vmatprep.subr.mxu0 0.0
        %946 = vmatpush1.msra.mxu0 0.0
        %947 = vmatprep.mubr.f32.mxu0 0.0
        %948 = vmatmul.mubr.f32.gmra.mrb[0].mxu0 %v881
        %v949 = vpop.f32.mrb[0].mxu0
        %v950 = vadd.f32 0.0, %v949
        %v951 = vpop.f32.mrb[0].mxu0
        %952 = vdwg.mxu0
        %953 = vrot.lane.b32.xlu0 %v447, 72
        %v954 = vpop.permute.xlu0 %953
        %955 = vrot.lane.b32.xlu0 %v447, 104
        %v956 = vpop.permute.xlu0 %955
        %v958 = vsel %vm459, %v954, 0
        %960 = vmatprep.subr.mxu0 0.0
        %961 = vmatpush1.msra.mxu0 %v956
        %962 = vmatprep.subr.mxu0 0.0
        %963 = vmatpush1.msra.mxu0 0.0
        %964 = vmatprep.subr.mxu0 0.0
        %965 = vmatpush1.msra.mxu0 0.0
        %966 = vmatprep.subr.mxu0 0.0
        %967 = vmatpush1.msra.mxu0 0.0
        %968 = vmatprep.subr.mxu0 0.0
        %969 = vmatpush1.msra.mxu0 0.0
        %970 = vmatprep.subr.mxu0 0.0
        %971 = vmatpush1.msra.mxu0 0.0
        %972 = vmatprep.subr.mxu0 0.0
        %973 = vmatpush1.msra.mxu0 0.0
        %974 = vmatprep.subr.mxu0 0.0
        %975 = vmatpush1.msra.mxu0 0.0
        %976 = vmatprep.subr.mxu0 0.0
        %977 = vmatpush1.msra.mxu0 0.0
        %978 = vmatprep.subr.mxu0 0.0
        %979 = vmatpush1.msra.mxu0 0.0
        %980 = vmatprep.subr.mxu0 0.0
        %981 = vmatpush1.msra.mxu0 0.0
        %982 = vmatprep.subr.mxu0 0.0
        %983 = vmatpush1.msra.mxu0 0.0
        %984 = vmatprep.subr.mxu0 0.0
        %985 = vmatpush1.msra.mxu0 0.0
        %986 = vmatprep.subr.mxu0 0.0
        %987 = vmatpush1.msra.mxu0 0.0
        %988 = vmatprep.subr.mxu0 0.0
        %989 = vmatpush1.msra.mxu0 0.0
        %990 = vmatprep.subr.mxu0 0.0
        %991 = vmatpush1.msra.mxu0 0.0
        %992 = vmatprep.subr.mxu0 0.0
        %993 = vmatpush1.msra.mxu0 0.0
        %994 = vmatprep.subr.mxu0 0.0
        %995 = vmatpush1.msra.mxu0 0.0
        %996 = vmatprep.subr.mxu0 0.0
        %997 = vmatpush1.msra.mxu0 0.0
        %998 = vmatprep.subr.mxu0 0.0
        %999 = vmatpush1.msra.mxu0 0.0
        %1000 = vmatprep.subr.mxu0 0.0
        %1001 = vmatpush1.msra.mxu0 0.0
        %1002 = vmatprep.subr.mxu0 0.0
        %1003 = vmatpush1.msra.mxu0 0.0
        %1004 = vmatprep.subr.mxu0 0.0
        %1005 = vmatpush1.msra.mxu0 0.0
        %1006 = vmatprep.subr.mxu0 0.0
        %1007 = vmatpush1.msra.mxu0 0.0
        %1008 = vmatprep.subr.mxu0 0.0
        %1009 = vmatpush1.msra.mxu0 0.0
        %1010 = vmatprep.subr.mxu0 0.0
        %1011 = vmatpush1.msra.mxu0 0.0
        %1012 = vmatprep.subr.mxu0 0.0
        %1013 = vmatpush1.msra.mxu0 0.0
        %1014 = vmatprep.subr.mxu0 0.0
        %1015 = vmatpush1.msra.mxu0 0.0
        %1016 = vmatprep.subr.mxu0 0.0
        %1017 = vmatpush1.msra.mxu0 0.0
        %1018 = vmatprep.subr.mxu0 0.0
        %1019 = vmatpush1.msra.mxu0 0.0
        %1020 = vmatprep.subr.mxu0 0.0
        %1021 = vmatpush1.msra.mxu0 0.0
        %1022 = vmatprep.subr.mxu0 0.0
        %1023 = vmatpush1.msra.mxu0 0.0
        %1024 = vmatprep.mubr.f32.mxu0 0.0
        %1025 = vmatmul.mubr.f32.gmra.mrb[0].mxu0 %v958
        %v1026 = vpop.f32.mrb[0].mxu0
        %v1027 = vadd.f32 0.0, %v1026
        %v1028 = vpop.f32.mrb[0].mxu0
        %1029 = vdwg.mxu0
        %v1030 = vmul.f32 %v1027, 0.35355338
        %v1031 = vsel %vm455, -inf, %v1030
        %v1032 = vsel %vm459, %v1031, -inf
        %1033 = vmax.xlane.f32.xlu0 %v1032
        %v1034 = vpop.xlane.xlu0 %1033
        %v1035 = vsub.f32 %v1031, %v1034
        %v1036 = vmul.f32 %v1035, 1.442695
        %v1037 = vpow.pop %v1036
        %v1038 = vsel %vm459, %v1037, 0.0
        %1039 = vadd.xlane.f32.xlu0 %v1038
        %v1040 = vpop.xlane.xlu0 %1039
        %v1041 = vrcp.pop %v1040
        %v1042 = vmul.f32 %v1037, %v1041
        %1043 = vrot.lane.b32.xlu0 %v447, 40
        %v1044 = vpop.permute.xlu0 %1043
        %v1047 = vsel %vm459, %v1042, 0
        %1049 = vmatprep.subr.mxu0 0.0
        %1050 = vmatpush1.msra.mxu0 %v1044
        %1051 = vmatprep.subr.mxu0 0.0
        %1052 = vmatpush1.msra.mxu0 0.0
        %1053 = vmatprep.subr.mxu0 0.0
        %1054 = vmatpush1.msra.mxu0 0.0
        %1055 = vmatprep.subr.mxu0 0.0
        %1056 = vmatpush1.msra.mxu0 0.0
        %1057 = vmatprep.subr.mxu0 0.0
        %1058 = vmatpush1.msra.mxu0 0.0
        %1059 = vmatprep.subr.mxu0 0.0
        %1060 = vmatpush1.msra.mxu0 0.0
        %1061 = vmatprep.subr.mxu0 0.0
        %1062 = vmatpush1.msra.mxu0 0.0
        %1063 = vmatprep.subr.mxu0 0.0
        %1064 = vmatpush1.msra.mxu0 0.0
        %1065 = vmatprep.subr.mxu0 0.0
        %1066 = vmatpush1.msra.mxu0 0.0
        %1067 = vmatprep.subr.mxu0 0.0
        %1068 = vmatpush1.msra.mxu0 0.0
        %1069 = vmatprep.subr.mxu0 0.0
        %1070 = vmatpush1.msra.mxu0 0.0
        %1071 = vmatprep.subr.mxu0 0.0
        %1072 = vmatpush1.msra.mxu0 0.0
        %1073 = vmatprep.subr.mxu0 0.0
        %1074 = vmatpush1.msra.mxu0 0.0
        %1075 = vmatprep.subr.mxu0 0.0
        %1076 = vmatpush1.msra.mxu0 0.0
        %1077 = vmatprep.subr.mxu0 0.0
        %1078 = vmatpush1.msra.mxu0 0.0
        %1079 = vmatprep.subr.mxu0 0.0
        %1080 = vmatpush1.msra.mxu0 0.0
        %1081 = vmatprep.subr.mxu0 0.0
        %1082 = vmatpush1.msra.mxu0 0.0
        %1083 = vmatprep.subr.mxu0 0.0
        %1084 = vmatpush1.msra.mxu0 0.0
        %1085 = vmatprep.subr.mxu0 0.0
        %1086 = vmatpush1.msra.mxu0 0.0
        %1087 = vmatprep.subr.mxu0 0.0
        %1088 = vmatpush1.msra.mxu0 0.0
        %1089 = vmatprep.subr.mxu0 0.0
        %1090 = vmatpush1.msra.mxu0 0.0
        %1091 = vmatprep.subr.mxu0 0.0
        %1092 = vmatpush1.msra.mxu0 0.0
        %1093 = vmatprep.subr.mxu0 0.0
        %1094 = vmatpush1.msra.mxu0 0.0
        %1095 = vmatprep.subr.mxu0 0.0
        %1096 = vmatpush1.msra.mxu0 0.0
        %1097 = vmatprep.subr.mxu0 0.0
        %1098 = vmatpush1.msra.mxu0 0.0
        %1099 = vmatprep.subr.mxu0 0.0
        %1100 = vmatpush1.msra.mxu0 0.0
        %1101 = vmatprep.subr.mxu0 0.0
        %1102 = vmatpush1.msra.mxu0 0.0
        %1103 = vmatprep.subr.mxu0 0.0
        %1104 = vmatpush1.msra.mxu0 0.0
        %1105 = vmatprep.subr.mxu0 0.0
        %1106 = vmatpush1.msra.mxu0 0.0
        %1107 = vmatprep.subr.mxu0 0.0
        %1108 = vmatpush1.msra.mxu0 0.0
        %1109 = vmatprep.subr.mxu0 0.0
        %1110 = vmatpush1.msra.mxu0 0.0
        %1111 = vmatprep.subr.mxu0 0.0
        %1112 = vmatpush1.msra.mxu0 0.0
        %1113 = vmatprep.mubr.f32.mxu0 0.0
        %1114 = vmatmul.mubr.f32.gmra.mrb[0].mxu0 %v1047
        %v1115 = vpop.f32.mrb[0].mxu0
        %v1116 = vadd.f32 0.0, %v1115
        %v1117 = vpop.f32.mrb[0].mxu0
        %1118 = vdwg.mxu0
        %1120 = vrot.lane.b32.xlu0 %v784, 8
        %v1121 = vpop.permute.xlu0 %1120
        %1124 = vrot.lane.b32.xlu0 %v950, 16
        %v1125 = vpop.permute.xlu0 %1124
        %1128 = vrot.lane.b32.xlu0 %v1116, 24
        %v1129 = vpop.permute.xlu0 %1128
        %v1131 = vsel %vm459, %v618, %v1121
        %vm1132 = vcmask 130048
        %v1133 = vsel %vm1132, %v1131, %v1125
        %vm1134 = vcmask 195584
        %v1135 = vsel %vm1134, %v1133, %v1129
        %v1136 = vld [vmem:[%s3] sm:$0xff]
        %v1137 = vld [vmem:[%s3 + $0x8] sm:$0xff]
        %v1138 = vld [vmem:[%s3 + $0x10] sm:$0xff]
        %v1139 = vld [vmem:[%s3 + $0x18] sm:$0xff]
        %v1140 = vlaneseq
        %v1141 = vshrl.u32 %v1140, 7
        %v1142 = vsub.s32 0, %v1141
        %v1143 = vrot.slane %v348, %v1142
        %v1145 = vsel %vm349, %v1135, 0
        %1147 = vmatprep.subr.mxu0 0.0
        %1148 = vmatpush1.msra.mxu0 %v1136
        %1149 = vmatprep.subr.mxu0 0.0
        %1150 = vmatpush1.msra.mxu0 %v1137
        %1151 = vmatprep.subr.mxu0 0.0
        %1152 = vmatpush1.msra.mxu0 %v1138
        %1153 = vmatprep.subr.mxu0 0.0
        %1154 = vmatpush1.msra.mxu0 %v1139
        %1155 = vmatprep.subr.mxu0 0.0
        %1156 = vmatpush1.msra.mxu0 0.0
        %1157 = vmatprep.subr.mxu0 0.0
        %1158 = vmatpush1.msra.mxu0 0.0
        %1159 = vmatprep.subr.mxu0 0.0
        %1160 = vmatpush1.msra.mxu0 0.0
        %1161 = vmatprep.subr.mxu0 0.0
        %1162 = vmatpush1.msra.mxu0 0.0
        %1163 = vmatprep.subr.mxu0 0.0
        %1164 = vmatpush1.msra.mxu0 0.0
        %1165 = vmatprep.subr.mxu0 0.0
        %1166 = vmatpush1.msra.mxu0 0.0
        %1167 = vmatprep.subr.mxu0 0.0
        %1168 = vmatpush1.msra.mxu0 0.0
        %1169 = vmatprep.subr.mxu0 0.0
        %1170 = vmatpush1.msra.mxu0 0.0
        %1171 = vmatprep.subr.mxu0 0.0
        %1172 = vmatpush1.msra.mxu0 0.0
        %1173 = vmatprep.subr.mxu0 0.0
        %1174 = vmatpush1.msra.mxu0 0.0
        %1175 = vmatprep.subr.mxu0 0.0
        %1176 = vmatpush1.msra.mxu0 0.0
        %1177 = vmatprep.subr.mxu0 0.0
        %1178 = vmatpush1.msra.mxu0 0.0
        %1179 = vmatprep.subr.mxu0 0.0
        %1180 = vmatpush1.msra.mxu0 0.0
        %1181 = vmatprep.subr.mxu0 0.0
        %1182 = vmatpush1.msra.mxu0 0.0
        %1183 = vmatprep.subr.mxu0 0.0
        %1184 = vmatpush1.msra.mxu0 0.0
        %1185 = vmatprep.subr.mxu0 0.0
        %1186 = vmatpush1.msra.mxu0 0.0
        %1187 = vmatprep.subr.mxu0 0.0
        %1188 = vmatpush1.msra.mxu0 0.0
        %1189 = vmatprep.subr.mxu0 0.0
        %1190 = vmatpush1.msra.mxu0 0.0
        %1191 = vmatprep.subr.mxu0 0.0
        %1192 = vmatpush1.msra.mxu0 0.0
        %1193 = vmatprep.subr.mxu0 0.0
        %1194 = vmatpush1.msra.mxu0 0.0
        %1195 = vmatprep.subr.mxu0 0.0
        %1196 = vmatpush1.msra.mxu0 0.0
        %1197 = vmatprep.subr.mxu0 0.0
        %1198 = vmatpush1.msra.mxu0 0.0
        %1199 = vmatprep.subr.mxu0 0.0
        %1200 = vmatpush1.msra.mxu0 0.0
        %1201 = vmatprep.subr.mxu0 0.0
        %1202 = vmatpush1.msra.mxu0 0.0
        %1203 = vmatprep.subr.mxu0 0.0
        %1204 = vmatpush1.msra.mxu0 0.0
        %1205 = vmatprep.subr.mxu0 0.0
        %1206 = vmatpush1.msra.mxu0 0.0
        %1207 = vmatprep.subr.mxu0 0.0
        %1208 = vmatpush1.msra.mxu0 0.0
        %1209 = vmatprep.subr.mxu0 0.0
        %1210 = vmatpush1.msra.mxu0 0.0
        %1211 = vmatprep.mubr.f32.mxu0 0.0
        %1212 = vmatmul.mubr.f32.gmra.mrb[0].mxu0 %v1145
        %v1213 = vpop.f32.mrb[0].mxu0
        %v1214 = vadd.f32 %v1143, %v1213
        %v1215 = vpop.f32.mrb[0].mxu0
        %1216 = vdwg.mxu0
        %v1217 = vadd.f32 %v343, %v1214
        %v1218 = vsel %vm349, %v1217, 0.0
        %1219 = vadd.xlane.f32.xlu0 %v1218
        %v1220 = vpop.xlane.xlu0 %1219
        %v1221 = vmul.f32 %v1220, 0.03125
        %v1222 = vsub.f32 %v1217, %v1221
        %v1223 = vmul.f32 %v1222, %v1222
        %v1224 = vsel %vm349, %v1223, 0.0
        %1225 = vadd.xlane.f32.xlu0 %v1224
        %v1226 = vpop.xlane.xlu0 %1225
        %v1227 = vmul.f32 %v1226, 0.032258064
        %v1228 = vadd.f32 %v1227, 1e-05
        %v1229 = vrsqrt.pop %v1228
        %v1230 = vmul.f32 %v1222, %v1229
        %v1231 = vlaneseq
        %v1232 = vshrl.u32 %v1231, 7
        %v1233 = vsub.s32 0, %v1232
        %v1234 = vrot.slane %v346, %v1233
        %v1235 = vmul.f32 %v1230, %v1234
        %v1236 = vlaneseq
        %v1237 = vshrl.u32 %v1236, 7
        %v1238 = vsub.s32 0, %v1237
        %v1239 = vrot.slane %v347, %v1238
        %v1240 = vadd.f32 %v1235, %v1239
        %v1241 = vld [vmem:[%s4] sm:$0xff]
        %v1242 = vld [vmem:[%s4 + $0x8] sm:$0xff]
        %v1243 = vld [vmem:[%s4 + $0x10] sm:$0xff]
        %v1244 = vld [vmem:[%s4 + $0x18] sm:$0xff]
        %v1245 = vld [vmem:[%s4 + $0x20] sm:$0xff]
        %v1246 = vld [vmem:[%s4 + $0x28] sm:$0xff]
        %v1247 = vld [vmem:[%s4 + $0x30] sm:$0xff]
        %v1248 = vld [vmem:[%s4 + $0x38] sm:$0xff]
        %v1249 = vld [vmem:[%s4 + $0x40] sm:$0xff]
        %v1250 = vld [vmem:[%s4 + $0x48] sm:$0xff]
        %v1251 = vld [vmem:[%s4 + $0x50] sm:$0xff]
        %v1252 = vld [vmem:[%s4 + $0x58] sm:$0xff]
        %v1253 = vld [vmem:[%s5] sm:$0x7]
        %v1255 = vlaneseq
        %v1256 = vshrl.u32 %v1255, 7
        %v1257 = vsub.s32 0, %v1256
        %v1258 = vrot.slane %v1253, %v1257
        %v1259 = vlaneseq
        %v1260 = vshrl.u32 %v1259, 7
        %v1261 = vsub.s32 1, %v1260
        %v1262 = vrot.slane %v1253, %v1261
        %v1263 = vlaneseq
        %v1264 = vshrl.u32 %v1263, 7
        %v1265 = vsub.s32 2, %v1264
        %v1266 = vrot.slane %v1253, %v1265
        %v1271 = vsel %vm349, %v1240, 0
        %1273 = vmatprep.subr.mxu0 %v1242
        %1274 = vmatpush1.msra.mxu0 %v1241
        %1275 = vmatprep.subr.mxu0 %v1245
        %1276 = vmatpush1.msra.mxu0 %v1244
        %1277 = vmatprep.subr.mxu0 %v1248
        %1278 = vmatpush1.msra.mxu0 %v1247
        %1279 = vmatprep.subr.mxu0 %v1251
        %1280 = vmatpush1.msra.mxu0 %v1250
        %1281 = vmatprep.subr.mxu0 0.0
        %1282 = vmatpush1.msra.mxu0 0.0
        %1283 = vmatprep.subr.mxu0 0.0
        %1284 = vmatpush1.msra.mxu0 0.0
        %1285 = vmatprep.subr.mxu0 0.0
        %1286 = vmatpush1.msra.mxu0 0.0
        %1287 = vmatprep.subr.mxu0 0.0
        %1288 = vmatpush1.msra.mxu0 0.0
        %1289 = vmatprep.subr.mxu0 0.0
        %1290 = vmatpush1.msra.mxu0 0.0
        %1291 = vmatprep.subr.mxu0 0.0
        %1292 = vmatpush1.msra.mxu0 0.0
        %1293 = vmatprep.subr.mxu0 0.0
        %1294 = vmatpush1.msra.mxu0 0.0
        %1295 = vmatprep.subr.mxu0 0.0
        %1296 = vmatpush1.msra.mxu0 0.0
        %1297 = vmatprep.subr.mxu0 0.0
        %1298 = vmatpush1.msra.mxu0 0.0
        %1299 = vmatprep.subr.mxu0 0.0
        %1300 = vmatpush1.msra.mxu0 0.0
        %1301 = vmatprep.subr.mxu0 0.0
        %1302 = vmatpush1.msra.mxu0 0.0
        %1303 = vmatprep.subr.mxu0 0.0
        %1304 = vmatpush1.msra.mxu0 0.0
        %1305 = vmatprep.subr.mxu0 0.0
        %1306 = vmatpush1.msra.mxu0 0.0
        %1307 = vmatprep.subr.mxu0 0.0
        %1308 = vmatpush1.msra.mxu0 0.0
        %1309 = vmatprep.subr.mxu0 0.0
        %1310 = vmatpush1.msra.mxu0 0.0
        %1311 = vmatprep.subr.mxu0 0.0
        %1312 = vmatpush1.msra.mxu0 0.0
        %1313 = vmatprep.subr.mxu0 0.0
        %1314 = vmatpush1.msra.mxu0 0.0
        %1315 = vmatprep.subr.mxu0 0.0
        %1316 = vmatpush1.msra.mxu0 0.0
        %1317 = vmatprep.subr.mxu0 0.0
        %1318 = vmatpush1.msra.mxu0 0.0
        %1319 = vmatprep.subr.mxu0 0.0
        %1320 = vmatpush1.msra.mxu0 0.0
        %1321 = vmatprep.subr.mxu0 0.0
        %1322 = vmatpush1.msra.mxu0 0.0
        %1323 = vmatprep.subr.mxu0 0.0
        %1324 = vmatpush1.msra.mxu0 0.0
        %1325 = vmatprep.subr.mxu0 0.0
        %1326 = vmatpush1.msra.mxu0 0.0
        %1327 = vmatprep.subr.mxu0 0.0
        %1328 = vmatpush1.msra.mxu0 0.0
        %1329 = vmatprep.subr.mxu0 0.0
        %1330 = vmatpush1.msra.mxu0 0.0
        %1331 = vmatprep.subr.mxu0 0.0
        %1332 = vmatpush1.msra.mxu0 0.0
        %1333 = vmatprep.subr.mxu0 0.0
        %1334 = vmatpush1.msra.mxu0 0.0
        %1335 = vmatprep.subr.mxu0 0.0
        %1336 = vmatpush1.msra.mxu0 0.0
        %1337 = vmatprep.mubr.f32.mxu0 0.0
        %1338 = vmatmul.mubr.f32.gmra.mrb[0].mxu0 %v1271
        %v1339 = vpop.f32.mrb[0].mxu0
        %v1340 = vadd.f32 %v1258, %v1339
        %v1341 = vpop.f32.mrb[0].mxu0
        %v1342 = vadd.f32 %v1262, %v1341
        %1343 = vdwg.mxu0
        %1344 = vmatprep.subr.mxu0 0.0
        %1345 = vmatpush1.msra.mxu0 %v1243
        %1346 = vmatprep.subr.mxu0 0.0
        %1347 = vmatpush1.msra.mxu0 %v1246
        %1348 = vmatprep.subr.mxu0 0.0
        %1349 = vmatpush1.msra.mxu0 %v1249
        %1350 = vmatprep.subr.mxu0 0.0
        %1351 = vmatpush1.msra.mxu0 %v1252
        %1352 = vmatprep.subr.mxu0 0.0
        %1353 = vmatpush1.msra.mxu0 0.0
        %1354 = vmatprep.subr.mxu0 0.0
        %1355 = vmatpush1.msra.mxu0 0.0
        %1356 = vmatprep.subr.mxu0 0.0
        %1357 = vmatpush1.msra.mxu0 0.0
        %1358 = vmatprep.subr.mxu0 0.0
        %1359 = vmatpush1.msra.mxu0 0.0
        %1360 = vmatprep.subr.mxu0 0.0
        %1361 = vmatpush1.msra.mxu0 0.0
        %1362 = vmatprep.subr.mxu0 0.0
        %1363 = vmatpush1.msra.mxu0 0.0
        %1364 = vmatprep.subr.mxu0 0.0
        %1365 = vmatpush1.msra.mxu0 0.0
        %1366 = vmatprep.subr.mxu0 0.0
        %1367 = vmatpush1.msra.mxu0 0.0
        %1368 = vmatprep.subr.mxu0 0.0
        %1369 = vmatpush1.msra.mxu0 0.0
        %1370 = vmatprep.subr.mxu0 0.0
        %1371 = vmatpush1.msra.mxu0 0.0
        %1372 = vmatprep.subr.mxu0 0.0
        %1373 = vmatpush1.msra.mxu0 0.0
        %1374 = vmatprep.subr.mxu0 0.0
        %1375 = vmatpush1.msra.mxu0 0.0
        %1376 = vmatprep.subr.mxu0 0.0
        %1377 = vmatpush1.msra.mxu0 0.0
        %1378 = vmatprep.subr.mxu0 0.0
        %1379 = vmatpush1.msra.mxu0 0.0
        %1380 = vmatprep.subr.mxu0 0.0
        %1381 = vmatpush1.msra.mxu0 0.0
        %1382 = vmatprep.subr.mxu0 0.0
        %1383 = vmatpush1.msra.mxu0 0.0
        %1384 = vmatprep.subr.mxu0 0.0
        %1385 = vmatpush1.msra.mxu0 0.0
        %1386 = vmatprep.subr.mxu0 0.0
        %1387 = vmatpush1.msra.mxu0 0.0
        %1388 = vmatprep.subr.mxu0 0.0
        %1389 = vmatpush1.msra.mxu0 0.0
        %1390 = vmatprep.subr.mxu0 0.0
        %1391 = vmatpush1.msra.mxu0 0.0
        %1392 = vmatprep.subr.mxu0 0.0
        %1393 = vmatpush1.msra.mxu0 0.0
        %1394 = vmatprep.subr.mxu0 0.0
        %1395 = vmatpush1.msra.mxu0 0.0
        %1396 = vmatprep.subr.mxu0 0.0
        %1397 = vmatpush1.msra.mxu0 0.0
        %1398 = vmatprep.subr.mxu0 0.0
        %1399 = vmatpush1.msra.mxu0 0.0
        %1400 = vmatprep.subr.mxu0 0.0
        %1401 = vmatpush1.msra.mxu0 0.0
        %1402 = vmatprep.subr.mxu0 0.0
        %1403 = vmatpush1.msra.mxu0 0.0
        %1404 = vmatprep.subr.mxu0 0.0
        %1405 = vmatpush1.msra.mxu0 0.0
        %1406 = vmatprep.subr.mxu0 0.0
        %1407 = vmatpush1.msra.mxu0 0.0
        %1408 = vmatprep.mubr.f32.mxu0 0.0
        %1409 = vmatmul.mubr.f32.gmra.mrb[0].mxu0 %v1271
        %v1410 = vpop.f32.mrb[0].mxu0
        %v1411 = vadd.f32 %v1266, %v1410
        %v1412 = vpop.f32.mrb[0].mxu0
        %1413 = vdwg.mxu0
        %vm1414 = vcmask 15360
        %v1415 = vsel %vm1414, %v1411, -inf
        %1416 = vmax.xlane.f32.xlu0 %v1415
        %v1417 = vpop.xlane.xlu0 %1416
        %vm1418 = vcmp.eq.f32.partialorder %v1411, %v1417
        %v1419 = vsel %vm1418, %v453, 2
        %v1420 = vsel %vm1414, %v1419, 2147483647
        %v1421 = vand.u32 %v1420, 65535
        %v1422 = vshra.s32 %v1420, 16
        %v1423 = vcvt.s32.f32 %v1421
        %v1424 = vcvt.s32.f32 %v1422
        %1425 = vmin.xlane.f32.xlu0 %v1424
        %v1426 = vpop.xlane.xlu0 %1425
        %vm1427 = vcmp.eq.f32.partialorder %v1424, %v1426
        %v1428 = vsel %vm1427, %v1423, inf
        %1429 = vmin.xlane.f32.xlu0 %v1428
        %v1430 = vpop.xlane.xlu0 %1429
        %v1431 = vcvt.f32.s32 %v1430
        %v1432 = vcvt.f32.s32 %v1426
        %v1433 = vshll.u32 %v1432, 16
        %v1434 = vadd.s32 %v1433, %v1431
        %v1435 = vrot.slane %v1417, 4
        %v1436 = vmax.f32 %v1417, %v1435
        %v1437 = vrot.slane %v1436, 2
        %v1438 = vmax.f32 %v1436, %v1437
        %v1439 = vrot.slane %v1438, 1
        %v1440 = vmax.f32 %v1438, %v1439
        %v1441 = vsub.f32 %v1417, %v1440
        %v1442 = vmul.f32 %v1441, 1.442695
        %v1443 = vpow.pop %v1442
        %v1444 = vrot.slane %v1443, 4
        %v1445 = vadd.f32 %v1443, %v1444
        %v1446 = vrot.slane %v1445, 2
        %v1447 = vadd.f32 %v1445, %v1446
        %v1448 = vrot.slane %v1447, 1
        %v1449 = vadd.f32 %v1447, %v1448
        %v1450 = vrcp.pop %v1449
        %v1451 = vmul.f32 %v1443, %v1450
        %v1452 = vld [vmem:[#allocation2] sm:$0xff]
        %v1453 = vld [vmem:[#allocation2 + $0x8] sm:$0xff]
        %v1454 = vld [vmem:[#allocation2 + $0x10] sm:$0xff]
        %v1455 = vld [vmem:[#allocation2 + $0x18] sm:$0xff]
        %v1456 = vld [vmem:[#allocation2 + $0x20] sm:$0xff]
        %v1457 = vld [vmem:[#allocation2 + $0x28] sm:$0xff]
        %v1458 = vld [vmem:[#allocation2 + $0x30] sm:$0xff]
        %v1459 = vld [vmem:[#allocation2 + $0x38] sm:$0xff]
        %v1460 = vld [vmem:[#allocation2 + $0x40] sm:$0xff]
        %v1461 = vld [vmem:[#allocation2 + $0x48] sm:$0xff]
        %v1462 = vld [vmem:[#allocation2 + $0x50] sm:$0xff]
        %v1463 = vld [vmem:[#allocation2 + $0x58] sm:$0xff]
        %v1464 = vld [vmem:[#allocation2 + $0x60] sm:$0xff]
        %v1465 = vld [vmem:[#allocation2 + $0x68] sm:$0xff]
        %v1466 = vld [vmem:[#allocation2 + $0x70] sm:$0xff]
        %v1467 = vld [vmem:[#allocation2 + $0x78] sm:$0xff]
        %v1468 = vld [vmem:[#allocation2 + $0x80] sm:$0xff]
        %v1469 = vld [vmem:[#allocation2 + $0x88] sm:$0xff]
        %v1470 = vld [vmem:[#allocation2 + $0x90] sm:$0xff]
        %v1471 = vld [vmem:[#allocation2 + $0x98] sm:$0xff]
        %v1472 = vld [vmem:[#allocation2 + $0xa0] sm:$0xff]
        %v1473 = vld [vmem:[#allocation2 + $0xa8] sm:$0xff]
        %v1474 = vld [vmem:[#allocation2 + $0xb0] sm:$0xff]
        %v1475 = vld [vmem:[#allocation2 + $0xb8] sm:$0xff]
        %v1476 = vld [vmem:[#allocation2 + $0xc0] sm:$0xff]
        %v1477 = vld [vmem:[#allocation2 + $0xc8] sm:$0xff]
        %v1478 = vld [vmem:[#allocation2 + $0xd0] sm:$0xff]
        %v1479 = vld [vmem:[#allocation2 + $0xd8] sm:$0xff]
        %v1480 = vld [vmem:[#allocation2 + $0xe0] sm:$0xff]
        %v1481 = vld [vmem:[#allocation2 + $0xe8] sm:$0xff]
        %v1482 = vld [vmem:[#allocation2 + $0xf0] sm:$0xff]
        %v1483 = vld [vmem:[#allocation2 + $0xf8] sm:$0xff]
        %v1484 = vld [vmem:[%s7] sm:$0x3]
        %v1486 = vlaneseq
        %v1487 = vshrl.u32 %v1486, 7
        %v1488 = vsub.s32 0, %v1487
        %v1489 = vrot.slane %v1484, %v1488
        %v1490 = vlaneseq
        %v1491 = vshrl.u32 %v1490, 7
        %v1492 = vsub.s32 1, %v1491
        %v1493 = vrot.slane %v1484, %v1492
        %1496 = vmatprep.subr.mxu0 %v1453
        %1497 = vmatpush1.msra.mxu0 %v1452
        %1498 = vmatprep.subr.mxu0 %v1455
        %1499 = vmatpush1.msra.mxu0 %v1454
        %1500 = vmatprep.subr.mxu0 %v1457
        %1501 = vmatpush1.msra.mxu0 %v1456
        %1502 = vmatprep.subr.mxu0 %v1459
        %1503 = vmatpush1.msra.mxu0 %v1458
        %1504 = vmatprep.subr.mxu0 %v1461
        %1505 = vmatpush1.msra.mxu0 %v1460
        %1506 = vmatprep.subr.mxu0 %v1463
        %1507 = vmatpush1.msra.mxu0 %v1462
        %1508 = vmatprep.subr.mxu0 %v1465
        %1509 = vmatpush1.msra.mxu0 %v1464
        %1510 = vmatprep.subr.mxu0 %v1467
        %1511 = vmatpush1.msra.mxu0 %v1466
        %1512 = vmatprep.subr.mxu0 %v1469
        %1513 = vmatpush1.msra.mxu0 %v1468
        %1514 = vmatprep.subr.mxu0 %v1471
        %1515 = vmatpush1.msra.mxu0 %v1470
        %1516 = vmatprep.subr.mxu0 %v1473
        %1517 = vmatpush1.msra.mxu0 %v1472
        %1518 = vmatprep.subr.mxu0 %v1475
        %1519 = vmatpush1.msra.mxu0 %v1474
        %1520 = vmatprep.subr.mxu0 %v1477
        %1521 = vmatpush1.msra.mxu0 %v1476
        %1522 = vmatprep.subr.mxu0 %v1479
        %1523 = vmatpush1.msra.mxu0 %v1478
        %1524 = vmatprep.subr.mxu0 %v1481
        %1525 = vmatpush1.msra.mxu0 %v1480
        %1526 = vmatprep.subr.mxu0 %v1483
        %1527 = vmatpush1.msra.mxu0 %v1482
        %1528 = vmatprep.subr.mxu0 0.0
        %1529 = vmatpush1.msra.mxu0 0.0
        %1530 = vmatprep.subr.mxu0 0.0
        %1531 = vmatpush1.msra.mxu0 0.0
        %1532 = vmatprep.subr.mxu0 0.0
        %1533 = vmatpush1.msra.mxu0 0.0
        %1534 = vmatprep.subr.mxu0 0.0
        %1535 = vmatpush1.msra.mxu0 0.0
        %1536 = vmatprep.subr.mxu0 0.0
        %1537 = vmatpush1.msra.mxu0 0.0
        %1538 = vmatprep.subr.mxu0 0.0
        %1539 = vmatpush1.msra.mxu0 0.0
        %1540 = vmatprep.subr.mxu0 0.0
        %1541 = vmatpush1.msra.mxu0 0.0
        %1542 = vmatprep.subr.mxu0 0.0
        %1543 = vmatpush1.msra.mxu0 0.0
        %1544 = vmatprep.subr.mxu0 0.0
        %1545 = vmatpush1.msra.mxu0 0.0
        %1546 = vmatprep.subr.mxu0 0.0
        %1547 = vmatpush1.msra.mxu0 0.0
        %1548 = vmatprep.subr.mxu0 0.0
        %1549 = vmatpush1.msra.mxu0 0.0
        %1550 = vmatprep.subr.mxu0 0.0
        %1551 = vmatpush1.msra.mxu0 0.0
        %1552 = vmatprep.subr.mxu0 0.0
        %1553 = vmatpush1.msra.mxu0 0.0
        %1554 = vmatprep.subr.mxu0 0.0
        %1555 = vmatpush1.msra.mxu0 0.0
        %1556 = vmatprep.subr.mxu0 0.0
        %1557 = vmatpush1.msra.mxu0 0.0
        %1558 = vmatprep.subr.mxu0 0.0
        %1559 = vmatpush1.msra.mxu0 0.0
        %1560 = vmatprep.mubr.f32.mxu0 0.0
        %1561 = vmatmul.mubr.f32.gmra.mrb[0].mxu0 %v1340
        %v1562 = vpop.f32.mrb[0].mxu0
        %v1563 = vadd.f32 %v1489, %v1562
        %v1564 = vpop.f32.mrb[0].mxu0
        %v1565 = vadd.f32 %v1493, %v1564
        %1566 = vdwg.mxu0
        %v1567 = vld [vmem:[%s1 + $0x7] sm:$0x1]
        %s1569 = vtos %v1567
        %v1570 = vstv %s1569
        %v1572 = vmul.f32 %v1570, %v1563
        %v1573 = vxor.u32 %v1572, 2147483648
        %v1574 = vmul.f32 %v1573, 1.442695
        %v1575 = vpow.pop %v1574
        %v1576 = vadd.f32 %v1575, 1.0
        %v1577 = vrcp.pop %v1576
        %v1578 = vmul.f32 1.0, %v1577
        %v1579 = vmul.f32 %v1563, %v1578
        %vm1580 = vcmp.eq.s32.totalorder %v1434, 0
        %v1581 = vsel %vm1580, %v1451, 0.0
        %v1582 = vmul.f32 %v1579, %v1565
        %v1583 = vmul.f32 %v1581, %v1582
        %v1584 = vld [vmem:[%s1 + $0x5] sm:$0x1]
        %v1585 = vlaneseq
        %v1586 = vshrl.u32 %v1585, 7
        %v1587 = vsub.s32 0, %v1586
        %v1588 = vrot.slane %v1584, %v1587
        %v1589 = vmul.f32 %v1581, %v1588
        %v1590 = vadd.f32 %v1589, 0.0
        %s1591 = scalar_lea.vmem [#allocation2], 256
        %v1592 = vld [vmem:[%s1591] sm:$0xff]
        %v1593 = vld [vmem:[%s1591 + $0x8] sm:$0xff]
        %v1594 = vld [vmem:[%s1591 + $0x10] sm:$0xff]
        %v1595 = vld [vmem:[%s1591 + $0x18] sm:$0xff]
        %v1596 = vld [vmem:[%s1591 + $0x20] sm:$0xff]
        %v1597 = vld [vmem:[%s1591 + $0x28] sm:$0xff]
        %v1598 = vld [vmem:[%s1591 + $0x30] sm:$0xff]
        %v1599 = vld [vmem:[%s1591 + $0x38] sm:$0xff]
        %v1600 = vld [vmem:[%s1591 + $0x40] sm:$0xff]
        %v1601 = vld [vmem:[%s1591 + $0x48] sm:$0xff]
        %v1602 = vld [vmem:[%s1591 + $0x50] sm:$0xff]
        %v1603 = vld [vmem:[%s1591 + $0x58] sm:$0xff]
        %v1604 = vld [vmem:[%s1591 + $0x60] sm:$0xff]
        %v1605 = vld [vmem:[%s1591 + $0x68] sm:$0xff]
        %v1606 = vld [vmem:[%s1591 + $0x70] sm:$0xff]
        %v1607 = vld [vmem:[%s1591 + $0x78] sm:$0xff]
        %v1608 = vld [vmem:[%s1591 + $0x80] sm:$0xff]
        %v1609 = vld [vmem:[%s1591 + $0x88] sm:$0xff]
        %v1610 = vld [vmem:[%s1591 + $0x90] sm:$0xff]
        %v1611 = vld [vmem:[%s1591 + $0x98] sm:$0xff]
        %v1612 = vld [vmem:[%s1591 + $0xa0] sm:$0xff]
        %v1613 = vld [vmem:[%s1591 + $0xa8] sm:$0xff]
        %v1614 = vld [vmem:[%s1591 + $0xb0] sm:$0xff]
        %v1615 = vld [vmem:[%s1591 + $0xb8] sm:$0xff]
        %v1616 = vld [vmem:[%s1591 + $0xc0] sm:$0xff]
        %v1617 = vld [vmem:[%s1591 + $0xc8] sm:$0xff]
        %v1618 = vld [vmem:[%s1591 + $0xd0] sm:$0xff]
        %v1619 = vld [vmem:[%s1591 + $0xd8] sm:$0xff]
        %v1620 = vld [vmem:[%s1591 + $0xe0] sm:$0xff]
        %v1621 = vld [vmem:[%s1591 + $0xe8] sm:$0xff]
        %v1622 = vld [vmem:[%s1591 + $0xf0] sm:$0xff]
        %v1623 = vld [vmem:[%s1591 + $0xf8] sm:$0xff]
        %s1624 = scalar_lea.vmem %s7, 2
        %v1625 = vld [vmem:[%s1624] sm:$0x3]
        %v1627 = vlaneseq
        %v1628 = vshrl.u32 %v1627, 7
        %v1629 = vsub.s32 0, %v1628
        %v1630 = vrot.slane %v1625, %v1629
        %v1631 = vlaneseq
        %v1632 = vshrl.u32 %v1631, 7
        %v1633 = vsub.s32 1, %v1632
        %v1634 = vrot.slane %v1625, %v1633
        %1637 = vmatprep.subr.mxu0 %v1593
        %1638 = vmatpush1.msra.mxu0 %v1592
        %1639 = vmatprep.subr.mxu0 %v1595
        %1640 = vmatpush1.msra.mxu0 %v1594
        %1641 = vmatprep.subr.mxu0 %v1597
        %1642 = vmatpush1.msra.mxu0 %v1596
        %1643 = vmatprep.subr.mxu0 %v1599
        %1644 = vmatpush1.msra.mxu0 %v1598
        %1645 = vmatprep.subr.mxu0 %v1601
        %1646 = vmatpush1.msra.mxu0 %v1600
        %1647 = vmatprep.subr.mxu0 %v1603
        %1648 = vmatpush1.msra.mxu0 %v1602
        %1649 = vmatprep.subr.mxu0 %v1605
        %1650 = vmatpush1.msra.mxu0 %v1604
        %1651 = vmatprep.subr.mxu0 %v1607
        %1652 = vmatpush1.msra.mxu0 %v1606
        %1653 = vmatprep.subr.mxu0 %v1609
        %1654 = vmatpush1.msra.mxu0 %v1608
        %1655 = vmatprep.subr.mxu0 %v1611
        %1656 = vmatpush1.msra.mxu0 %v1610
        %1657 = vmatprep.subr.mxu0 %v1613
        %1658 = vmatpush1.msra.mxu0 %v1612
        %1659 = vmatprep.subr.mxu0 %v1615
        %1660 = vmatpush1.msra.mxu0 %v1614
        %1661 = vmatprep.subr.mxu0 %v1617
        %1662 = vmatpush1.msra.mxu0 %v1616
        %1663 = vmatprep.subr.mxu0 %v1619
        %1664 = vmatpush1.msra.mxu0 %v1618
        %1665 = vmatprep.subr.mxu0 %v1621
        %1666 = vmatpush1.msra.mxu0 %v1620
        %1667 = vmatprep.subr.mxu0 %v1623
        %1668 = vmatpush1.msra.mxu0 %v1622
        %1669 = vmatprep.subr.mxu0 0.0
        %1670 = vmatpush1.msra.mxu0 0.0
        %1671 = vmatprep.subr.mxu0 0.0
        %1672 = vmatpush1.msra.mxu0 0.0
        %1673 = vmatprep.subr.mxu0 0.0
        %1674 = vmatpush1.msra.mxu0 0.0
        %1675 = vmatprep.subr.mxu0 0.0
        %1676 = vmatpush1.msra.mxu0 0.0
        %1677 = vmatprep.subr.mxu0 0.0
        %1678 = vmatpush1.msra.mxu0 0.0
        %1679 = vmatprep.subr.mxu0 0.0
        %1680 = vmatpush1.msra.mxu0 0.0
        %1681 = vmatprep.subr.mxu0 0.0
        %1682 = vmatpush1.msra.mxu0 0.0
        %1683 = vmatprep.subr.mxu0 0.0
        %1684 = vmatpush1.msra.mxu0 0.0
        %1685 = vmatprep.subr.mxu0 0.0
        %1686 = vmatpush1.msra.mxu0 0.0
        %1687 = vmatprep.subr.mxu0 0.0
        %1688 = vmatpush1.msra.mxu0 0.0
        %1689 = vmatprep.subr.mxu0 0.0
        %1690 = vmatpush1.msra.mxu0 0.0
        %1691 = vmatprep.subr.mxu0 0.0
        %1692 = vmatpush1.msra.mxu0 0.0
        %1693 = vmatprep.subr.mxu0 0.0
        %1694 = vmatpush1.msra.mxu0 0.0
        %1695 = vmatprep.subr.mxu0 0.0
        %1696 = vmatpush1.msra.mxu0 0.0
        %1697 = vmatprep.subr.mxu0 0.0
        %1698 = vmatpush1.msra.mxu0 0.0
        %1699 = vmatprep.subr.mxu0 0.0
        %1700 = vmatpush1.msra.mxu0 0.0
        %1701 = vmatprep.mubr.f32.mxu0 0.0
        %1702 = vmatmul.mubr.f32.gmra.mrb[0].mxu0 %v1342
        %v1703 = vpop.f32.mrb[0].mxu0
        %v1704 = vadd.f32 %v1630, %v1703
        %v1705 = vpop.f32.mrb[0].mxu0
        %v1706 = vadd.f32 %v1634, %v1705
        %1707 = vdwg.mxu0
        %1708 = vrot.lane.b32.xlu0 %v1567, 127
        %v1709 = vpop.permute.xlu0 %1708
        %s1710 = vtos %v1709
        %v1711 = vstv %s1710
        %v1713 = vmul.f32 %v1711, %v1704
        %v1714 = vxor.u32 %v1713, 2147483648
        %v1715 = vmul.f32 %v1714, 1.442695
        %v1716 = vpow.pop %v1715
        %v1717 = vadd.f32 %v1716, 1.0
        %v1718 = vrcp.pop %v1717
        %v1719 = vmul.f32 1.0, %v1718
        %v1720 = vmul.f32 %v1704, %v1719
        %vm1721 = vcmp.eq.s32.totalorder %v1434, 1
        %v1722 = vsel %vm1721, %v1451, 0.0
        %v1723 = vmul.f32 %v1720, %v1706
        %v1724 = vmul.f32 %v1722, %v1723
        %v1725 = vld [vmem:[%s1 + $0x6] sm:$0x1]
        %v1726 = vlaneseq
        %v1727 = vshrl.u32 %v1726, 7
        %v1728 = vsub.s32 0, %v1727
        %v1729 = vrot.slane %v1725, %v1728
        %v1730 = vmul.f32 %v1722, %v1729
        %v1731 = vadd.f32 %v1590, %v1730
        %v1732 = vld [vmem:[%s8] sm:$0xff]
        %v1733 = vld [vmem:[%s8 + $0x8] sm:$0xff]
        %v1734 = vld [vmem:[%s8 + $0x10] sm:$0xff]
        %v1735 = vld [vmem:[%s8 + $0x18] sm:$0xff]
        %v1736 = vld [vmem:[%s8 + $0x20] sm:$0xff]
        %v1737 = vld [vmem:[%s8 + $0x28] sm:$0xff]
        %v1738 = vld [vmem:[%s8 + $0x30] sm:$0xff]
        %v1739 = vld [vmem:[%s8 + $0x38] sm:$0xff]
        %v1740 = vld [vmem:[%s8 + $0x40] sm:$0xff]
        %v1741 = vld [vmem:[%s8 + $0x48] sm:$0xff]
        %v1742 = vld [vmem:[%s8 + $0x50] sm:$0xff]
        %v1743 = vld [vmem:[%s8 + $0x58] sm:$0xff]
        %v1744 = vld [vmem:[%s8 + $0x60] sm:$0xff]
        %v1745 = vld [vmem:[%s8 + $0x68] sm:$0xff]
        %v1746 = vld [vmem:[%s8 + $0x70] sm:$0xff]
        %v1747 = vld [vmem:[%s8 + $0x78] sm:$0xff]
        %v1748 = vld [vmem:[%s8 + $0x80] sm:$0xff]
        %v1749 = vld [vmem:[%s8 + $0x88] sm:$0xff]
        %v1750 = vld [vmem:[%s8 + $0x90] sm:$0xff]
        %v1751 = vld [vmem:[%s8 + $0x98] sm:$0xff]
        %v1752 = vld [vmem:[%s8 + $0xa0] sm:$0xff]
        %v1753 = vld [vmem:[%s8 + $0xa8] sm:$0xff]
        %v1754 = vld [vmem:[%s8 + $0xb0] sm:$0xff]
        %v1755 = vld [vmem:[%s8 + $0xb8] sm:$0xff]
        %v1756 = vld [vmem:[%s8 + $0xc0] sm:$0xff]
        %v1757 = vld [vmem:[%s8 + $0xc8] sm:$0xff]
        %v1758 = vld [vmem:[%s8 + $0xd0] sm:$0xff]
        %v1759 = vld [vmem:[%s8 + $0xd8] sm:$0xff]
        %v1760 = vld [vmem:[%s8 + $0xe0] sm:$0xff]
        %v1761 = vld [vmem:[%s8 + $0xe8] sm:$0xff]
        %v1762 = vld [vmem:[%s8 + $0xf0] sm:$0xff]
        %v1763 = vld [vmem:[%s8 + $0xf8] sm:$0xff]
        %1764 = vmatprep.subr.mxu0 0.0
        %1765 = vmatpush1.msra.mxu0 %v1732
        %1766 = vmatprep.subr.mxu0 0.0
        %1767 = vmatpush1.msra.mxu0 %v1733
        %1768 = vmatprep.subr.mxu0 0.0
        %1769 = vmatpush1.msra.mxu0 %v1734
        %1770 = vmatprep.subr.mxu0 0.0
        %1771 = vmatpush1.msra.mxu0 %v1735
        %1772 = vmatprep.subr.mxu0 0.0
        %1773 = vmatpush1.msra.mxu0 %v1736
        %1774 = vmatprep.subr.mxu0 0.0
        %1775 = vmatpush1.msra.mxu0 %v1737
        %1776 = vmatprep.subr.mxu0 0.0
        %1777 = vmatpush1.msra.mxu0 %v1738
        %1778 = vmatprep.subr.mxu0 0.0
        %1779 = vmatpush1.msra.mxu0 %v1739
        %1780 = vmatprep.subr.mxu0 0.0
        %1781 = vmatpush1.msra.mxu0 %v1740
        %1782 = vmatprep.subr.mxu0 0.0
        %1783 = vmatpush1.msra.mxu0 %v1741
        %1784 = vmatprep.subr.mxu0 0.0
        %1785 = vmatpush1.msra.mxu0 %v1742
        %1786 = vmatprep.subr.mxu0 0.0
        %1787 = vmatpush1.msra.mxu0 %v1743
        %1788 = vmatprep.subr.mxu0 0.0
        %1789 = vmatpush1.msra.mxu0 %v1744
        %1790 = vmatprep.subr.mxu0 0.0
        %1791 = vmatpush1.msra.mxu0 %v1745
        %1792 = vmatprep.subr.mxu0 0.0
        %1793 = vmatpush1.msra.mxu0 %v1746
        %1794 = vmatprep.subr.mxu0 0.0
        %1795 = vmatpush1.msra.mxu0 %v1747
        %1796 = vmatprep.subr.mxu0 0.0
        %1797 = vmatpush1.msra.mxu0 %v1748
        %1798 = vmatprep.subr.mxu0 0.0
        %1799 = vmatpush1.msra.mxu0 %v1749
        %1800 = vmatprep.subr.mxu0 0.0
        %1801 = vmatpush1.msra.mxu0 %v1750
        %1802 = vmatprep.subr.mxu0 0.0
        %1803 = vmatpush1.msra.mxu0 %v1751
        %1804 = vmatprep.subr.mxu0 0.0
        %1805 = vmatpush1.msra.mxu0 %v1752
        %1806 = vmatprep.subr.mxu0 0.0
        %1807 = vmatpush1.msra.mxu0 %v1753
        %1808 = vmatprep.subr.mxu0 0.0
        %1809 = vmatpush1.msra.mxu0 %v1754
        %1810 = vmatprep.subr.mxu0 0.0
        %1811 = vmatpush1.msra.mxu0 %v1755
        %1812 = vmatprep.subr.mxu0 0.0
        %1813 = vmatpush1.msra.mxu0 %v1756
        %1814 = vmatprep.subr.mxu0 0.0
        %1815 = vmatpush1.msra.mxu0 %v1757
        %1816 = vmatprep.subr.mxu0 0.0
        %1817 = vmatpush1.msra.mxu0 %v1758
        %1818 = vmatprep.subr.mxu0 0.0
        %1819 = vmatpush1.msra.mxu0 %v1759
        %1820 = vmatprep.subr.mxu0 0.0
        %1821 = vmatpush1.msra.mxu0 %v1760
        %1822 = vmatprep.subr.mxu0 0.0
        %1823 = vmatpush1.msra.mxu0 %v1761
        %1824 = vmatprep.subr.mxu0 0.0
        %1825 = vmatpush1.msra.mxu0 %v1762
        %1826 = vmatprep.subr.mxu0 0.0
        %1827 = vmatpush1.msra.mxu0 %v1763
        %1828 = vmatprep.mubr.f32.mxu0 %v1724
        %1829 = vmatmul.mubr.f32.gmra.mrb[0].mxu0 %v1583
        %v1830 = vpop.f32.mrb[0].mxu0
        %v1831 = vadd.f32 %v1731, %v1830
        %v1832 = vpop.f32.mrb[0].mxu0
        %1833 = vdwg.mxu0
        %v1834 = vadd.f32 %v1217, %v1831
        %1835 = vst.msk [vmem:[%s338] sm:$0xff] %vm349, %v1834
        %s1836 = sand.u32 %s226, 1
        %s1837 = scalar_lea.sflag [#allocation4], %s1836
        %s1838 = sand.u32 %s226, 1
        %s1839 = smul.addr %s1838, 8
        %s1840 = scalar_lea.vmem [#allocation5], %s1839
        // Predicated region
        $region61: #{tpu_custom_call.1} parent=55 // pred_check
          %p1841 = pneg %p236
        $region62: #{tpu_custom_call.1} parent=55 // pred_check_branch
          %1843 = sbr.rel (%p1841) target = $region64
        $region63: #{tpu_custom_call.1} parent=55 // pred_region
          %s1845 = ssub.s32 128, 128
          %1846 = vsyncadd %s1837, %s1845
          %s1847 = smul.addr %s24, 128
          %s1848 = scalar_lea.hbm %s9, %s1847
          %s1850 = sshll.u32 %s1840, 4
          %s1851 = int_to_ptr.vmem [resolvable:$true] %s1850
          %1853 = dma.vmem_to_hbm [thread:$0]  %s1851, 128, %s1848, %s1837
        $region64: #{tpu_custom_call.1} parent=55 // pred_fallthru
          _
      $region56: #{tpu_custom_call.1} parent=5 // pred_fallthru
        _
      %p1854 = scmp.le.s32.totalorder 2, %s19
      // Predicated region
      $region65: #{tpu_custom_call.1} parent=5 // pred_check
        %p1855 = pneg %p1854
      $region66: #{tpu_custom_call.1} parent=5 // pred_check_branch
        %1857 = sbr.rel (%p1855) target = $region68
      $region67: #{tpu_custom_call.1} parent=5 // pred_region
        %s1858 = ssub.s32 %s19, 2
        // Predicated region
        $region69: #{tpu_custom_call.1} parent=67 // pred_check
          %p1859 = pneg %p242
        $region70: #{tpu_custom_call.1} parent=67 // pred_check_branch
          %1861 = sbr.rel (%p1859) target = $region72
        $region71: #{tpu_custom_call.1} parent=67 // pred_region
          %s1862 = sand.u32 %s227, 1
          %s1863 = scalar_lea.sflag [#allocation4], %s1862
          %s1864 = sand.u32 %s227, 1
          %s1865 = smul.addr %s1864, 8
          %s1866 = scalar_lea.vmem [#allocation5], %s1865
          %1867 = dma.done %s1863, 128
        $region72: #{tpu_custom_call.1} parent=67 // pred_fallthru
          _
      $region68: #{tpu_custom_call.1} parent=5 // pred_fallthru
        _
    $region6: #{tpu_custom_call.1} parent=1 // loop_footer
      %s23 = sadd.s32 1, %s19
    $region7: #{tpu_custom_call.1} parent=1 // loop_footer_branch
      %18 = sbr.rel target = $region3
    $region8: #{tpu_custom_call.1} parent=1 // loop_exit
      _
    %1868 = vsyncpa [#allocation3], 1
    %s1869 = scalar_lea.sflag [#allocation3], 1
    %1870 = vsyncpa %s1869, 1
    %1871 = vsyncpa [#allocation4], 1
    %s1872 = scalar_lea.sflag [#allocation4], 1
    %1873 = vsyncpa %s1872, 1

</llo_original>
